<compile_context>
chip_gen: v7x
topology: tpu7x:2x2x1
jax: 0.10.0
libtpu: 0.0.40
codegen_flags: <defaults>
</compile_context>

<pallas_src>
import jax
import jax.numpy as jnp
from jax.experimental import pallas as pl
from jax.experimental.pallas import tpu as pltpu


def lstm_cls_kernel(x_ref, wih_ref, whh_ref, b_ref, fcw_ref, fcb_ref, out_ref):
    # Static shapes:
    #   x_ref:   [T*Bp, D]  (time-major, flattened, batch padded to Bp)
    #   wih_ref: [D, 4H]    whh_ref: [H, 4H]   b_ref: [1, 4H]
    #   fcw_ref: [H, Cp]    fcb_ref: [1, Cp]   out_ref: [Bp, Cp]
    Bp = out_ref.shape[0]
    TB, _D = x_ref.shape
    T = TB // Bp
    H = whh_ref.shape[0]

    # Hoist all loop-invariant VMEM reads out of the unrolled recurrence.
    whh = whh_ref[...]          # [H, 4H]
    wih = wih_ref[...]          # [D, 4H]
    bias = b_ref[...]           # [1, 4H]

    # Hoisted input projection: one MXU matmul with M = T*Bp rows.
    xg = jnp.dot(x_ref[...], wih, preferred_element_type=jnp.float32) + bias

    h = jnp.zeros((Bp, H), jnp.float32)
    c = jnp.zeros((Bp, H), jnp.float32)

    # T is small & static -> fully unrolled; xg[t*Bp:(t+1)*Bp] is an aligned
    # static sublane slice (Bp multiple of 8), h/c stay in vregs.
    for t in range(T):
        gates = xg[t * Bp:(t + 1) * Bp, :] + jnp.dot(
            h, whh, preferred_element_type=jnp.float32)          # [Bp, 4H]
        i_g = jax.nn.sigmoid(gates[:, 0 * H:1 * H])
        f_g = jax.nn.sigmoid(gates[:, 1 * H:2 * H])
        g_g = jnp.tanh(gates[:, 2 * H:3 * H])
        o_g = jax.nn.sigmoid(gates[:, 3 * H:4 * H])
        c = f_g * c + i_g * g_g
        h = o_g * jnp.tanh(c)

    # dropout (eval) -> identity; ReLU; FC with lane-dense padded output.
    h_relu = jnp.maximum(h, 0.0)
    logits = (jnp.dot(h_relu, fcw_ref[...], preferred_element_type=jnp.float32)
              + fcb_ref[...])
    out_ref[...] = logits.astype(out_ref.dtype)


def lstm_classifier_forward(x, w_ih, w_hh, b_ih, b_hh, fc_w, fc_b):
    """x: [B, T, D] float32 (batch_first). Returns (logits [B, C], {})."""
    B, T, D = x.shape
    H = w_hh.shape[1]                  # w_hh: [4H, H] (PyTorch layout)
    C = fc_w.shape[0]                  # fc_w: [C, H]  (PyTorch layout)
    B_pad = 8 * pl.cdiv(B, 8)          # sublane-dense batch
    C_pad = 128 * pl.cdiv(C, 128)      # lane-dense output width

    # Parameter / input prep (plain XLA glue): right-multiply layout,
    # batch-padded time-major flattened x, lane-dense padded FC.
    x_p = x
    if B_pad != B:
        x_p = jnp.zeros((B_pad, T, D), x.dtype).at[:B].set(x)
    x_tm = jnp.transpose(x_p, (1, 0, 2)).reshape(T * B_pad, D)   # [T*Bp, D]
    wih_t = w_ih.T                                               # [D, 4H]
    whh_t = w_hh.T                                               # [H, 4H]
    bias = (b_ih + b_hh).reshape(1, 4 * H)                       # [1, 4H]
    fcw_pad = jnp.zeros((H, C_pad), jnp.float32).at[:, :C].set(fc_w.T)
    fcb_pad = jnp.zeros((1, C_pad), jnp.float32).at[:, :C].set(fc_b)

    vmem = pl.BlockSpec(memory_space=pltpu.MemorySpace.VMEM)
    logits_pad = pl.pallas_call(
        lstm_cls_kernel,
        out_shape=jax.ShapeDtypeStruct((B_pad, C_pad), jnp.float32),
        in_specs=[vmem, vmem, vmem, vmem, vmem, vmem],
        out_specs=vmem,
    )(x_tm, wih_t, whh_t, bias, fcw_pad, fcb_pad)

    return logits_pad[:B, :C], {}


def _reference_forward(x, w_ih, w_hh, b_ih, b_hh, fc_w, fc_b):
    """Pure-JAX reference mirroring PyTorch nn.LSTM semantics (eval mode)."""
    B, T, D = x.shape
    H = w_hh.shape[1]

    def step(carry, x_t):
        h, c = carry
        gates = x_t @ w_ih.T + b_ih + h @ w_hh.T + b_hh
        i = jax.nn.sigmoid(gates[:, 0 * H:1 * H])
        f = jax.nn.sigmoid(gates[:, 1 * H:2 * H])
        g = jnp.tanh(gates[:, 2 * H:3 * H])
        o = jax.nn.sigmoid(gates[:, 3 * H:4 * H])
        c = f * c + i * g
        h = o * jnp.tanh(c)
        return (h, c), h

    (h, _), _ = jax.lax.scan(step,
                             (jnp.zeros((B, H)), jnp.zeros((B, H))),
                             jnp.transpose(x, (1, 0, 2)))
    out = jnp.maximum(h, 0.0) @ fc_w.T + fc_b
    return out


if __name__ == "__main__":
    # Small shapes consistent with the module (input_size -> D, hidden -> H,
    # num_classes -> C).
    B, T, D, H, C = 8, 6, 128, 128, 8

    key = jax.random.PRNGKey(0)
    ks = jax.random.split(key, 7)
    scale = 0.05
    x = jax.random.normal(ks[0], (B, T, D), jnp.float32)
    w_ih = scale * jax.random.normal(ks[1], (4 * H, D), jnp.float32)
    w_hh = scale * jax.random.normal(ks[2], (4 * H, H), jnp.float32)
    b_ih = scale * jax.random.normal(ks[3], (4 * H,), jnp.float32)
    b_hh = scale * jax.random.normal(ks[4], (4 * H,), jnp.float32)
    fc_w = scale * jax.random.normal(ks[5], (C, H), jnp.float32)
    fc_b = scale * jax.random.normal(ks[6], (C,), jnp.float32)

    out, _aux = lstm_classifier_forward(x, w_ih, w_hh, b_ih, b_hh, fc_w, fc_b)
    out = jax.block_until_ready(out)

    ref = _reference_forward(x, w_ih, w_hh, b_ih, b_hh, fc_w, fc_b)
    assert out.shape == (B, C)
    assert jnp.allclose(out, ref, atol=1e-4, rtol=1e-4), "mismatch vs reference"

    print("KERNEL_OK")
</pallas_src>

<mosaic_0001>
module attributes {stable_mosaic.version = 11 : i64} {
  func.func @lstm_cls_kernel(%arg0: memref<48x128xf32, #tpu.memory_space<vmem>>, %arg1: memref<128x512xf32, #tpu.memory_space<vmem>>, %arg2: memref<128x512xf32, #tpu.memory_space<vmem>>, %arg3: memref<1x512xf32, #tpu.memory_space<vmem>>, %arg4: memref<128x128xf32, #tpu.memory_space<vmem>>, %arg5: memref<1x128xf32, #tpu.memory_space<vmem>>, %arg6: memref<8x128xf32, #tpu.memory_space<vmem>>) attributes {dimension_semantics = [], scalar_prefetch = 0 : i64, scratch_operands = 0 : i64, tpu.core_type = #tpu.core_type<tc>} {
    %c0 = arith.constant 0 : index
    %c0_0 = arith.constant 0 : index
    %0 = vector.load %arg2[%c0, %c0_0] : memref<128x512xf32, #tpu.memory_space<vmem>>, vector<128x512xf32>
    %c0_1 = arith.constant 0 : index
    %c0_2 = arith.constant 0 : index
    %1 = vector.load %arg1[%c0_1, %c0_2] : memref<128x512xf32, #tpu.memory_space<vmem>>, vector<128x512xf32>
    %c0_3 = arith.constant 0 : index
    %c0_4 = arith.constant 0 : index
    %2 = vector.load %arg3[%c0_3, %c0_4] : memref<1x512xf32, #tpu.memory_space<vmem>>, vector<1x512xf32>
    %c0_5 = arith.constant 0 : index
    %c0_6 = arith.constant 0 : index
    %3 = vector.load %arg0[%c0_5, %c0_6] : memref<48x128xf32, #tpu.memory_space<vmem>>, vector<48x128xf32>
    %cst = arith.constant dense<0.000000e+00> : vector<48x512xf32>
    %4 = tpu.matmul %3, %1, %cst {dimension_numbers = #tpu.dot_dimension_numbers<[1], [0], [0], [1], [0, 0, 1, 1], [], []>} : vector<48x128xf32>, vector<128x512xf32>, vector<48x512xf32> -> vector<48x512xf32>
    %5 = vector.broadcast %2 : vector<1x512xf32> to vector<48x512xf32>
    %6 = arith.addf %4, %5 : vector<48x512xf32>
    %cst_7 = arith.constant 0.000000e+00 : f32
    %7 = vector.broadcast %cst_7 : f32 to vector<8x128xf32>
    %cst_8 = arith.constant 0.000000e+00 : f32
    %8 = vector.broadcast %cst_8 : f32 to vector<8x128xf32>
    %9 = vector.extract_strided_slice %6 {offsets = [0, 0], sizes = [8, 512], strides = [1, 1]} : vector<48x512xf32> to vector<8x512xf32>
    %cst_9 = arith.constant dense<0.000000e+00> : vector<8x512xf32>
    %10 = tpu.matmul %7, %0, %cst_9 {dimension_numbers = #tpu.dot_dimension_numbers<[1], [0], [0], [1], [0, 0, 1, 1], [], []>} : vector<8x128xf32>, vector<128x512xf32>, vector<8x512xf32> -> vector<8x512xf32>
    %11 = arith.addf %9, %10 : vector<8x512xf32>
    %12 = vector.extract_strided_slice %11 {offsets = [0, 0], sizes = [8, 128], strides = [1, 1]} : vector<8x512xf32> to vector<8x128xf32>
    %13 = arith.negf %12 : vector<8x128xf32>
    %14 = math.exp %13 : vector<8x128xf32>
    %cst_10 = arith.constant 1.000000e+00 : f32
    %15 = vector.broadcast %cst_10 : f32 to vector<8x128xf32>
    %16 = arith.addf %15, %14 : vector<8x128xf32>
    %17 = arith.divf %15, %16 : vector<8x128xf32>
    %18 = vector.extract_strided_slice %11 {offsets = [0, 128], sizes = [8, 128], strides = [1, 1]} : vector<8x512xf32> to vector<8x128xf32>
    %19 = arith.negf %18 : vector<8x128xf32>
    %20 = math.exp %19 : vector<8x128xf32>
    %cst_11 = arith.constant 1.000000e+00 : f32
    %21 = vector.broadcast %cst_11 : f32 to vector<8x128xf32>
    %22 = arith.addf %21, %20 : vector<8x128xf32>
    %23 = arith.divf %21, %22 : vector<8x128xf32>
    %24 = vector.extract_strided_slice %11 {offsets = [0, 256], sizes = [8, 128], strides = [1, 1]} : vector<8x512xf32> to vector<8x128xf32>
    %25 = math.tanh %24 : vector<8x128xf32>
    %26 = vector.extract_strided_slice %11 {offsets = [0, 384], sizes = [8, 128], strides = [1, 1]} : vector<8x512xf32> to vector<8x128xf32>
    %27 = arith.negf %26 : vector<8x128xf32>
    %28 = math.exp %27 : vector<8x128xf32>
    %cst_12 = arith.constant 1.000000e+00 : f32
    %29 = vector.broadcast %cst_12 : f32 to vector<8x128xf32>
    %30 = arith.addf %29, %28 : vector<8x128xf32>
    %31 = arith.divf %29, %30 : vector<8x128xf32>
    %32 = arith.mulf %23, %8 : vector<8x128xf32>
    %33 = arith.mulf %17, %25 : vector<8x128xf32>
    %34 = arith.addf %32, %33 : vector<8x128xf32>
    %35 = math.tanh %34 : vector<8x128xf32>
    %36 = arith.mulf %31, %35 : vector<8x128xf32>
    %37 = vector.extract_strided_slice %6 {offsets = [8, 0], sizes = [8, 512], strides = [1, 1]} : vector<48x512xf32> to vector<8x512xf32>
    %cst_13 = arith.constant dense<0.000000e+00> : vector<8x512xf32>
    %38 = tpu.matmul %36, %0, %cst_13 {dimension_numbers = #tpu.dot_dimension_numbers<[1], [0], [0], [1], [0, 0, 1, 1], [], []>} : vector<8x128xf32>, vector<128x512xf32>, vector<8x512xf32> -> vector<8x512xf32>
    %39 = arith.addf %37, %38 : vector<8x512xf32>
    %40 = vector.extract_strided_slice %39 {offsets = [0, 0], sizes = [8, 128], strides = [1, 1]} : vector<8x512xf32> to vector<8x128xf32>
    %41 = arith.negf %40 : vector<8x128xf32>
    %42 = math.exp %41 : vector<8x128xf32>
    %cst_14 = arith.constant 1.000000e+00 : f32
    %43 = vector.broadcast %cst_14 : f32 to vector<8x128xf32>
    %44 = arith.addf %43, %42 : vector<8x128xf32>
    %45 = arith.divf %43, %44 : vector<8x128xf32>
    %46 = vector.extract_strided_slice %39 {offsets = [0, 128], sizes = [8, 128], strides = [1, 1]} : vector<8x512xf32> to vector<8x128xf32>
    %47 = arith.negf %46 : vector<8x128xf32>
    %48 = math.exp %47 : vector<8x128xf32>
    %cst_15 = arith.constant 1.000000e+00 : f32
    %49 = vector.broadcast %cst_15 : f32 to vector<8x128xf32>
    %50 = arith.addf %49, %48 : vector<8x128xf32>
    %51 = arith.divf %49, %50 : vector<8x128xf32>
    %52 = vector.extract_strided_slice %39 {offsets = [0, 256], sizes = [8, 128], strides = [1, 1]} : vector<8x512xf32> to vector<8x128xf32>
    %53 = math.tanh %52 : vector<8x128xf32>
    %54 = vector.extract_strided_slice %39 {offsets = [0, 384], sizes = [8, 128], strides = [1, 1]} : vector<8x512xf32> to vector<8x128xf32>
    %55 = arith.negf %54 : vector<8x128xf32>
    %56 = math.exp %55 : vector<8x128xf32>
    %cst_16 = arith.constant 1.000000e+00 : f32
    %57 = vector.broadcast %cst_16 : f32 to vector<8x128xf32>
    %58 = arith.addf %57, %56 : vector<8x128xf32>
    %59 = arith.divf %57, %58 : vector<8x128xf32>
    %60 = arith.mulf %51, %34 : vector<8x128xf32>
    %61 = arith.mulf %45, %53 : vector<8x128xf32>
    %62 = arith.addf %60, %61 : vector<8x128xf32>
    %63 = math.tanh %62 : vector<8x128xf32>
    %64 = arith.mulf %59, %63 : vector<8x128xf32>
    %65 = vector.extract_strided_slice %6 {offsets = [16, 0], sizes = [8, 512], strides = [1, 1]} : vector<48x512xf32> to vector<8x512xf32>
    %cst_17 = arith.constant dense<0.000000e+00> : vector<8x512xf32>
    %66 = tpu.matmul %64, %0, %cst_17 {dimension_numbers = #tpu.dot_dimension_numbers<[1], [0], [0], [1], [0, 0, 1, 1], [], []>} : vector<8x128xf32>, vector<128x512xf32>, vector<8x512xf32> -> vector<8x512xf32>
    %67 = arith.addf %65, %66 : vector<8x512xf32>
    %68 = vector.extract_strided_slice %67 {offsets = [0, 0], sizes = [8, 128], strides = [1, 1]} : vector<8x512xf32> to vector<8x128xf32>
    %69 = arith.negf %68 : vector<8x128xf32>
    %70 = math.exp %69 : vector<8x128xf32>
    %cst_18 = arith.constant 1.000000e+00 : f32
    %71 = vector.broadcast %cst_18 : f32 to vector<8x128xf32>
    %72 = arith.addf %71, %70 : vector<8x128xf32>
    %73 = arith.divf %71, %72 : vector<8x128xf32>
    %74 = vector.extract_strided_slice %67 {offsets = [0, 128], sizes = [8, 128], strides = [1, 1]} : vector<8x512xf32> to vector<8x128xf32>
    %75 = arith.negf %74 : vector<8x128xf32>
    %76 = math.exp %75 : vector<8x128xf32>
    %cst_19 = arith.constant 1.000000e+00 : f32
    %77 = vector.broadcast %cst_19 : f32 to vector<8x128xf32>
    %78 = arith.addf %77, %76 : vector<8x128xf32>
    %79 = arith.divf %77, %78 : vector<8x128xf32>
    %80 = vector.extract_strided_slice %67 {offsets = [0, 256], sizes = [8, 128], strides = [1, 1]} : vector<8x512xf32> to vector<8x128xf32>
    %81 = math.tanh %80 : vector<8x128xf32>
    %82 = vector.extract_strided_slice %67 {offsets = [0, 384], sizes = [8, 128], strides = [1, 1]} : vector<8x512xf32> to vector<8x128xf32>
    %83 = arith.negf %82 : vector<8x128xf32>
    %84 = math.exp %83 : vector<8x128xf32>
    %cst_20 = arith.constant 1.000000e+00 : f32
    %85 = vector.broadcast %cst_20 : f32 to vector<8x128xf32>
    %86 = arith.addf %85, %84 : vector<8x128xf32>
    %87 = arith.divf %85, %86 : vector<8x128xf32>
    %88 = arith.mulf %79, %62 : vector<8x128xf32>
    %89 = arith.mulf %73, %81 : vector<8x128xf32>
    %90 = arith.addf %88, %89 : vector<8x128xf32>
    %91 = math.tanh %90 : vector<8x128xf32>
    %92 = arith.mulf %87, %91 : vector<8x128xf32>
    %93 = vector.extract_strided_slice %6 {offsets = [24, 0], sizes = [8, 512], strides = [1, 1]} : vector<48x512xf32> to vector<8x512xf32>
    %cst_21 = arith.constant dense<0.000000e+00> : vector<8x512xf32>
    %94 = tpu.matmul %92, %0, %cst_21 {dimension_numbers = #tpu.dot_dimension_numbers<[1], [0], [0], [1], [0, 0, 1, 1], [], []>} : vector<8x128xf32>, vector<128x512xf32>, vector<8x512xf32> -> vector<8x512xf32>
    %95 = arith.addf %93, %94 : vector<8x512xf32>
    %96 = vector.extract_strided_slice %95 {offsets = [0, 0], sizes = [8, 128], strides = [1, 1]} : vector<8x512xf32> to vector<8x128xf32>
    %97 = arith.negf %96 : vector<8x128xf32>
    %98 = math.exp %97 : vector<8x128xf32>
    %cst_22 = arith.constant 1.000000e+00 : f32
    %99 = vector.broadcast %cst_22 : f32 to vector<8x128xf32>
    %100 = arith.addf %99, %98 : vector<8x128xf32>
    %101 = arith.divf %99, %100 : vector<8x128xf32>
    %102 = vector.extract_strided_slice %95 {offsets = [0, 128], sizes = [8, 128], strides = [1, 1]} : vector<8x512xf32> to vector<8x128xf32>
    %103 = arith.negf %102 : vector<8x128xf32>
    %104 = math.exp %103 : vector<8x128xf32>
    %cst_23 = arith.constant 1.000000e+00 : f32
    %105 = vector.broadcast %cst_23 : f32 to vector<8x128xf32>
    %106 = arith.addf %105, %104 : vector<8x128xf32>
    %107 = arith.divf %105, %106 : vector<8x128xf32>
    %108 = vector.extract_strided_slice %95 {offsets = [0, 256], sizes = [8, 128], strides = [1, 1]} : vector<8x512xf32> to vector<8x128xf32>
    %109 = math.tanh %108 : vector<8x128xf32>
    %110 = vector.extract_strided_slice %95 {offsets = [0, 384], sizes = [8, 128], strides = [1, 1]} : vector<8x512xf32> to vector<8x128xf32>
    %111 = arith.negf %110 : vector<8x128xf32>
    %112 = math.exp %111 : vector<8x128xf32>
    %cst_24 = arith.constant 1.000000e+00 : f32
    %113 = vector.broadcast %cst_24 : f32 to vector<8x128xf32>
    %114 = arith.addf %113, %112 : vector<8x128xf32>
    %115 = arith.divf %113, %114 : vector<8x128xf32>
    %116 = arith.mulf %107, %90 : vector<8x128xf32>
    %117 = arith.mulf %101, %109 : vector<8x128xf32>
    %118 = arith.addf %116, %117 : vector<8x128xf32>
    %119 = math.tanh %118 : vector<8x128xf32>
    %120 = arith.mulf %115, %119 : vector<8x128xf32>
    %121 = vector.extract_strided_slice %6 {offsets = [32, 0], sizes = [8, 512], strides = [1, 1]} : vector<48x512xf32> to vector<8x512xf32>
    %cst_25 = arith.constant dense<0.000000e+00> : vector<8x512xf32>
    %122 = tpu.matmul %120, %0, %cst_25 {dimension_numbers = #tpu.dot_dimension_numbers<[1], [0], [0], [1], [0, 0, 1, 1], [], []>} : vector<8x128xf32>, vector<128x512xf32>, vector<8x512xf32> -> vector<8x512xf32>
    %123 = arith.addf %121, %122 : vector<8x512xf32>
    %124 = vector.extract_strided_slice %123 {offsets = [0, 0], sizes = [8, 128], strides = [1, 1]} : vector<8x512xf32> to vector<8x128xf32>
    %125 = arith.negf %124 : vector<8x128xf32>
    %126 = math.exp %125 : vector<8x128xf32>
    %cst_26 = arith.constant 1.000000e+00 : f32
    %127 = vector.broadcast %cst_26 : f32 to vector<8x128xf32>
    %128 = arith.addf %127, %126 : vector<8x128xf32>
    %129 = arith.divf %127, %128 : vector<8x128xf32>
    %130 = vector.extract_strided_slice %123 {offsets = [0, 128], sizes = [8, 128], strides = [1, 1]} : vector<8x512xf32> to vector<8x128xf32>
    %131 = arith.negf %130 : vector<8x128xf32>
    %132 = math.exp %131 : vector<8x128xf32>
    %cst_27 = arith.constant 1.000000e+00 : f32
    %133 = vector.broadcast %cst_27 : f32 to vector<8x128xf32>
    %134 = arith.addf %133, %132 : vector<8x128xf32>
    %135 = arith.divf %133, %134 : vector<8x128xf32>
    %136 = vector.extract_strided_slice %123 {offsets = [0, 256], sizes = [8, 128], strides = [1, 1]} : vector<8x512xf32> to vector<8x128xf32>
    %137 = math.tanh %136 : vector<8x128xf32>
    %138 = vector.extract_strided_slice %123 {offsets = [0, 384], sizes = [8, 128], strides = [1, 1]} : vector<8x512xf32> to vector<8x128xf32>
    %139 = arith.negf %138 : vector<8x128xf32>
    %140 = math.exp %139 : vector<8x128xf32>
    %cst_28 = arith.constant 1.000000e+00 : f32
    %141 = vector.broadcast %cst_28 : f32 to vector<8x128xf32>
    %142 = arith.addf %141, %140 : vector<8x128xf32>
    %143 = arith.divf %141, %142 : vector<8x128xf32>
    %144 = arith.mulf %135, %118 : vector<8x128xf32>
    %145 = arith.mulf %129, %137 : vector<8x128xf32>
    %146 = arith.addf %144, %145 : vector<8x128xf32>
    %147 = math.tanh %146 : vector<8x128xf32>
    %148 = arith.mulf %143, %147 : vector<8x128xf32>
    %149 = vector.extract_strided_slice %6 {offsets = [40, 0], sizes = [8, 512], strides = [1, 1]} : vector<48x512xf32> to vector<8x512xf32>
    %cst_29 = arith.constant dense<0.000000e+00> : vector<8x512xf32>
    %150 = tpu.matmul %148, %0, %cst_29 {dimension_numbers = #tpu.dot_dimension_numbers<[1], [0], [0], [1], [0, 0, 1, 1], [], []>} : vector<8x128xf32>, vector<128x512xf32>, vector<8x512xf32> -> vector<8x512xf32>
    %151 = arith.addf %149, %150 : vector<8x512xf32>
    %152 = vector.extract_strided_slice %151 {offsets = [0, 0], sizes = [8, 128], strides = [1, 1]} : vector<8x512xf32> to vector<8x128xf32>
    %153 = arith.negf %152 : vector<8x128xf32>
    %154 = math.exp %153 : vector<8x128xf32>
    %cst_30 = arith.constant 1.000000e+00 : f32
    %155 = vector.broadcast %cst_30 : f32 to vector<8x128xf32>
    %156 = arith.addf %155, %154 : vector<8x128xf32>
    %157 = arith.divf %155, %156 : vector<8x128xf32>
    %158 = vector.extract_strided_slice %151 {offsets = [0, 128], sizes = [8, 128], strides = [1, 1]} : vector<8x512xf32> to vector<8x128xf32>
    %159 = arith.negf %158 : vector<8x128xf32>
    %160 = math.exp %159 : vector<8x128xf32>
    %cst_31 = arith.constant 1.000000e+00 : f32
    %161 = vector.broadcast %cst_31 : f32 to vector<8x128xf32>
    %162 = arith.addf %161, %160 : vector<8x128xf32>
    %163 = arith.divf %161, %162 : vector<8x128xf32>
    %164 = vector.extract_strided_slice %151 {offsets = [0, 256], sizes = [8, 128], strides = [1, 1]} : vector<8x512xf32> to vector<8x128xf32>
    %165 = math.tanh %164 : vector<8x128xf32>
    %166 = vector.extract_strided_slice %151 {offsets = [0, 384], sizes = [8, 128], strides = [1, 1]} : vector<8x512xf32> to vector<8x128xf32>
    %167 = arith.negf %166 : vector<8x128xf32>
    %168 = math.exp %167 : vector<8x128xf32>
    %cst_32 = arith.constant 1.000000e+00 : f32
    %169 = vector.broadcast %cst_32 : f32 to vector<8x128xf32>
    %170 = arith.addf %169, %168 : vector<8x128xf32>
    %171 = arith.divf %169, %170 : vector<8x128xf32>
    %172 = arith.mulf %163, %146 : vector<8x128xf32>
    %173 = arith.mulf %157, %165 : vector<8x128xf32>
    %174 = arith.addf %172, %173 : vector<8x128xf32>
    %175 = math.tanh %174 : vector<8x128xf32>
    %176 = arith.mulf %171, %175 : vector<8x128xf32>
    %cst_33 = arith.constant 0.000000e+00 : f32
    %177 = vector.broadcast %cst_33 : f32 to vector<8x128xf32>
    %178 = arith.maximumf %176, %177 : vector<8x128xf32>
    %c0_34 = arith.constant 0 : index
    %c0_35 = arith.constant 0 : index
    %179 = vector.load %arg4[%c0_34, %c0_35] : memref<128x128xf32, #tpu.memory_space<vmem>>, vector<128x128xf32>
    %cst_36 = arith.constant dense<0.000000e+00> : vector<8x128xf32>
    %180 = tpu.matmul %178, %179, %cst_36 {dimension_numbers = #tpu.dot_dimension_numbers<[1], [0], [0], [1], [0, 0, 1, 1], [], []>} : vector<8x128xf32>, vector<128x128xf32>, vector<8x128xf32> -> vector<8x128xf32>
    %c0_37 = arith.constant 0 : index
    %c0_38 = arith.constant 0 : index
    %181 = vector.load %arg5[%c0_37, %c0_38] : memref<1x128xf32, #tpu.memory_space<vmem>>, vector<1x128xf32>
    %182 = vector.broadcast %181 : vector<1x128xf32> to vector<8x128xf32>
    %183 = arith.addf %180, %182 : vector<8x128xf32>
    %c0_39 = arith.constant 0 : index
    %c0_40 = arith.constant 0 : index
    %184 = vector.load %arg6[%c0_39, %c0_40] : memref<8x128xf32, #tpu.memory_space<vmem>>, vector<8x128xf32>
    tpu.vector_store %arg6[%c0_39, %c0_40], %183 {strides = array<i32>} : memref<8x128xf32, #tpu.memory_space<vmem>>, vector<8x128xf32>,
    return
  }
}

</mosaic_0001>

<llo_original>
// kernel: tpu_custom_call.1
$region0: #{tpu_custom_call.1}
  #allocation0 [shape = 'u32[]', space=smem, size = 0x4, offset = 0x4, fixed_abs, tag = 'smem constant byte address 0x4 - core index']
  #allocation1 [shape = 'u32[144,128]{1,0:T(1,128)}', space=vmem, size = 0x12000, scoped, tag = 'internal scratch']
  %s0 = inlined_call_operand.hbm [shape: f32[48,128], index: 0, kind: input, shape index: {}]
  %s1 = inlined_call_operand.hbm [shape: f32[128,512], index: 1, kind: input, shape index: {}]
  %s2 = inlined_call_operand.hbm [shape: f32[128,512], index: 2, kind: input, shape index: {}]
  %s3 = inlined_call_operand.vmem [shape: f32[1,512], index: 3, kind: input, shape index: {}]
  %s4 = inlined_call_operand.hbm [shape: f32[128,128], index: 4, kind: input, shape index: {}]
  %s5 = inlined_call_operand.vmem [shape: f32[1,128], index: 5, kind: input, shape index: {}]
  %s6 = inlined_call_operand.hbm [shape: f32[8,128], index: 6, kind: output, shape index: {}]
  %s7 = sld [smem:[#allocation0]]
  $region50: #{tpu_custom_call.1} parent=0
    _
  %s9 = ssub.s32 1, %s7
  %s10 = scalar_select 0, %s9, %s7
  $region1: #{tpu_custom_call.1} parent=0
    #allocation2 [shape = 'u8[24576]{0}', space=vmem, size = 0x6000, scoped, tag = 'input window, operand 0, single buffered']
    #allocation3 [shape = 's32[1]{0}', space=sflag, size = 0x4, scoped, tag = 'scoped memory for tpu_custom_call.1']
    #allocation4 [shape = 's32[1]{0}', space=sflag, size = 0x4, scoped, tag = 'scoped memory for tpu_custom_call.1']
    #allocation5 [shape = 'u8[262144]{0}', space=vmem, size = 0x40000, scoped, tag = 'input window, operand 1, single buffered']
    #allocation6 [shape = 's32[1]{0}', space=sflag, size = 0x4, scoped, tag = 'scoped memory for tpu_custom_call.1']
    #allocation7 [shape = 'u8[262144]{0}', space=vmem, size = 0x40000, scoped, tag = 'input window, operand 2, single buffered']
    #allocation8 [shape = 'u8[65536]{0}', space=vmem, size = 0x10000, scoped, tag = 'input window, operand 4, single buffered']
    #allocation9 [shape = 's32[1]{0}', space=sflag, size = 0x4, scoped, tag = 'scoped memory for tpu_custom_call.1']
    #allocation10 [shape = 'u8[4096]{0}', space=vmem, size = 0x1000, scoped, tag = 'output window, operand 0, single buffered']
    %11 = vsyncpa [#allocation3], 0
    %12 = vsyncpa [#allocation6], 0
    %13 = vsyncpa [#allocation9], 0
    %14 = vsyncpa [#allocation4], 0
    // Predicated region
    $region2: #{tpu_custom_call.1} parent=1 // pred_check
      _
    $region3: #{tpu_custom_call.1} parent=1 // pred_check_branch
      %16 = sbr.rel (0) target = $region5
    $region4: #{tpu_custom_call.1} parent=1 // pred_region
      %s18 = ssub.s32 768, 768
      %19 = vsyncadd [#allocation3], %s18
      %s20 = sshll.u32 [#allocation2], 4
      %s21 = int_to_ptr.vmem [resolvable:$true] %s20
      %26 = dma.hbm_to_vmem [thread:$0]  %s0, 768, %s21, [#allocation3], 128, 128, 8
    $region5: #{tpu_custom_call.1} parent=1 // pred_fallthru
      _
    // Predicated region
    $region6: #{tpu_custom_call.1} parent=1 // pred_check
      _
    $region7: #{tpu_custom_call.1} parent=1 // pred_check_branch
      %28 = sbr.rel (0) target = $region9
    $region8: #{tpu_custom_call.1} parent=1 // pred_region
      %s30 = ssub.s32 8192, 8192
      %31 = vsyncadd [#allocation6], %s30
      %s32 = sshll.u32 [#allocation5], 4
      %s33 = int_to_ptr.vmem [resolvable:$true] %s32
      %38 = dma.hbm_to_vmem [thread:$0]  %s1, 8192, %s33, [#allocation6], 512, 512, 32
    $region9: #{tpu_custom_call.1} parent=1 // pred_fallthru
      _
    // Predicated region
    $region10: #{tpu_custom_call.1} parent=1 // pred_check
      _
    $region11: #{tpu_custom_call.1} parent=1 // pred_check_branch
      %40 = sbr.rel (0) target = $region13
    $region12: #{tpu_custom_call.1} parent=1 // pred_region
      %s42 = ssub.s32 8192, 8192
      %43 = vsyncadd [#allocation6], %s42
      %s44 = sshll.u32 [#allocation7], 4
      %s45 = int_to_ptr.vmem [resolvable:$true] %s44
      %50 = dma.hbm_to_vmem [thread:$0]  %s2, 8192, %s45, [#allocation6], 512, 512, 32
    $region13: #{tpu_custom_call.1} parent=1 // pred_fallthru
      _
    // Predicated region
    $region14: #{tpu_custom_call.1} parent=1 // pred_check
      _
    $region15: #{tpu_custom_call.1} parent=1 // pred_check_branch
      %52 = sbr.rel (0) target = $region17
    $region16: #{tpu_custom_call.1} parent=1 // pred_region
      _
    $region17: #{tpu_custom_call.1} parent=1 // pred_fallthru
      _
    // Predicated region
    $region18: #{tpu_custom_call.1} parent=1 // pred_check
      _
    $region19: #{tpu_custom_call.1} parent=1 // pred_check_branch
      %54 = sbr.rel (0) target = $region21
    $region20: #{tpu_custom_call.1} parent=1 // pred_region
      %s56 = ssub.s32 2048, 2048
      %57 = vsyncadd [#allocation9], %s56
      %s58 = sshll.u32 [#allocation8], 4
      %s59 = int_to_ptr.vmem [resolvable:$true] %s58
      %64 = dma.hbm_to_vmem [thread:$0]  %s4, 2048, %s59, [#allocation9], 128, 128, 8
    $region21: #{tpu_custom_call.1} parent=1 // pred_fallthru
      _
    // Predicated region
    $region22: #{tpu_custom_call.1} parent=1 // pred_check
      _
    $region23: #{tpu_custom_call.1} parent=1 // pred_check_branch
      %66 = sbr.rel (0) target = $region25
    $region24: #{tpu_custom_call.1} parent=1 // pred_region
      _
    $region25: #{tpu_custom_call.1} parent=1 // pred_fallthru
      _
    // Predicated region
    $region26: #{tpu_custom_call.1} parent=1 // pred_check
      _
    $region27: #{tpu_custom_call.1} parent=1 // pred_check_branch
      %68 = sbr.rel (0) target = $region29
    $region28: #{tpu_custom_call.1} parent=1 // pred_region
      %69 = dma.done [#allocation3], 768
    $region29: #{tpu_custom_call.1} parent=1 // pred_fallthru
      _
    // Predicated region
    $region30: #{tpu_custom_call.1} parent=1 // pred_check
      _
    $region31: #{tpu_custom_call.1} parent=1 // pred_check_branch
      %71 = sbr.rel (0) target = $region33
    $region32: #{tpu_custom_call.1} parent=1 // pred_region
      %72 = dma.done [#allocation6], 8192
    $region33: #{tpu_custom_call.1} parent=1 // pred_fallthru
      _
    // Predicated region
    $region34: #{tpu_custom_call.1} parent=1 // pred_check
      _
    $region35: #{tpu_custom_call.1} parent=1 // pred_check_branch
      %74 = sbr.rel (0) target = $region37
    $region36: #{tpu_custom_call.1} parent=1 // pred_region
      %75 = dma.done [#allocation6], 8192
    $region37: #{tpu_custom_call.1} parent=1 // pred_fallthru
      _
    // Predicated region
    $region38: #{tpu_custom_call.1} parent=1 // pred_check
      _
    $region39: #{tpu_custom_call.1} parent=1 // pred_check_branch
      %77 = sbr.rel (0) target = $region41
    $region40: #{tpu_custom_call.1} parent=1 // pred_region
      %78 = dma.done [#allocation9], 2048
    $region41: #{tpu_custom_call.1} parent=1 // pred_fallthru
      _
    %v79 = vld [vmem:[#allocation7] sm:$0xff]
    %v80 = vld [vmem:[#allocation7 + $0x8] sm:$0xff]
    %v81 = vld [vmem:[#allocation7 + $0x10] sm:$0xff]
    %v82 = vld [vmem:[#allocation7 + $0x18] sm:$0xff]
    %v83 = vld [vmem:[#allocation7 + $0x20] sm:$0xff]
    %v84 = vld [vmem:[#allocation7 + $0x28] sm:$0xff]
    %v85 = vld [vmem:[#allocation7 + $0x30] sm:$0xff]
    %v86 = vld [vmem:[#allocation7 + $0x38] sm:$0xff]
    %v87 = vld [vmem:[#allocation7 + $0x40] sm:$0xff]
    %v88 = vld [vmem:[#allocation7 + $0x48] sm:$0xff]
    %v89 = vld [vmem:[#allocation7 + $0x50] sm:$0xff]
    %v90 = vld [vmem:[#allocation7 + $0x58] sm:$0xff]
    %v91 = vld [vmem:[#allocation7 + $0x60] sm:$0xff]
    %v92 = vld [vmem:[#allocation7 + $0x68] sm:$0xff]
    %v93 = vld [vmem:[#allocation7 + $0x70] sm:$0xff]
    %v94 = vld [vmem:[#allocation7 + $0x78] sm:$0xff]
    %v95 = vld [vmem:[#allocation7 + $0x80] sm:$0xff]
    %v96 = vld [vmem:[#allocation7 + $0x88] sm:$0xff]
    %v97 = vld [vmem:[#allocation7 + $0x90] sm:$0xff]
    %v98 = vld [vmem:[#allocation7 + $0x98] sm:$0xff]
    %v99 = vld [vmem:[#allocation7 + $0xa0] sm:$0xff]
    %v100 = vld [vmem:[#allocation7 + $0xa8] sm:$0xff]
    %v101 = vld [vmem:[#allocation7 + $0xb0] sm:$0xff]
    %v102 = vld [vmem:[#allocation7 + $0xb8] sm:$0xff]
    %v103 = vld [vmem:[#allocation7 + $0xc0] sm:$0xff]
    %v104 = vld [vmem:[#allocation7 + $0xc8] sm:$0xff]
    %v105 = vld [vmem:[#allocation7 + $0xd0] sm:$0xff]
    %v106 = vld [vmem:[#allocation7 + $0xd8] sm:$0xff]
    %v107 = vld [vmem:[#allocation7 + $0xe0] sm:$0xff]
    %v108 = vld [vmem:[#allocation7 + $0xe8] sm:$0xff]
    %v109 = vld [vmem:[#allocation7 + $0xf0] sm:$0xff]
    %v110 = vld [vmem:[#allocation7 + $0xf8] sm:$0xff]
    %v111 = vld [vmem:[#allocation7 + $0x100] sm:$0xff]
    %v112 = vld [vmem:[#allocation7 + $0x108] sm:$0xff]
    %v113 = vld [vmem:[#allocation7 + $0x110] sm:$0xff]
    %v114 = vld [vmem:[#allocation7 + $0x118] sm:$0xff]
    %v115 = vld [vmem:[#allocation7 + $0x120] sm:$0xff]
    %v116 = vld [vmem:[#allocation7 + $0x128] sm:$0xff]
    %v117 = vld [vmem:[#allocation7 + $0x130] sm:$0xff]
    %v118 = vld [vmem:[#allocation7 + $0x138] sm:$0xff]
    %v119 = vld [vmem:[#allocation7 + $0x140] sm:$0xff]
    %v120 = vld [vmem:[#allocation7 + $0x148] sm:$0xff]
    %v121 = vld [vmem:[#allocation7 + $0x150] sm:$0xff]
    %v122 = vld [vmem:[#allocation7 + $0x158] sm:$0xff]
    %v123 = vld [vmem:[#allocation7 + $0x160] sm:$0xff]
    %v124 = vld [vmem:[#allocation7 + $0x168] sm:$0xff]
    %v125 = vld [vmem:[#allocation7 + $0x170] sm:$0xff]
    %v126 = vld [vmem:[#allocation7 + $0x178] sm:$0xff]
    %v127 = vld [vmem:[#allocation7 + $0x180] sm:$0xff]
    %v128 = vld [vmem:[#allocation7 + $0x188] sm:$0xff]
    %v129 = vld [vmem:[#allocation7 + $0x190] sm:$0xff]
    %v130 = vld [vmem:[#allocation7 + $0x198] sm:$0xff]
    %v131 = vld [vmem:[#allocation7 + $0x1a0] sm:$0xff]
    %v132 = vld [vmem:[#allocation7 + $0x1a8] sm:$0xff]
    %v133 = vld [vmem:[#allocation7 + $0x1b0] sm:$0xff]
    %v134 = vld [vmem:[#allocation7 + $0x1b8] sm:$0xff]
    %v135 = vld [vmem:[#allocation7 + $0x1c0] sm:$0xff]
    %v136 = vld [vmem:[#allocation7 + $0x1c8] sm:$0xff]
    %v137 = vld [vmem:[#allocation7 + $0x1d0] sm:$0xff]
    %v138 = vld [vmem:[#allocation7 + $0x1d8] sm:$0xff]
    %v139 = vld [vmem:[#allocation7 + $0x1e0] sm:$0xff]
    %v140 = vld [vmem:[#allocation7 + $0x1e8] sm:$0xff]
    %v141 = vld [vmem:[#allocation7 + $0x1f0] sm:$0xff]
    %v142 = vld [vmem:[#allocation7 + $0x1f8] sm:$0xff]
    %v143 = vld [vmem:[#allocation5] sm:$0xff]
    %v144 = vld [vmem:[#allocation5 + $0x8] sm:$0xff]
    %v145 = vld [vmem:[#allocation5 + $0x10] sm:$0xff]
    %v146 = vld [vmem:[#allocation5 + $0x18] sm:$0xff]
    %v147 = vld [vmem:[#allocation5 + $0x20] sm:$0xff]
    %v148 = vld [vmem:[#allocation5 + $0x28] sm:$0xff]
    %v149 = vld [vmem:[#allocation5 + $0x30] sm:$0xff]
    %v150 = vld [vmem:[#allocation5 + $0x38] sm:$0xff]
    %v151 = vld [vmem:[#allocation5 + $0x40] sm:$0xff]
    %v152 = vld [vmem:[#allocation5 + $0x48] sm:$0xff]
    %v153 = vld [vmem:[#allocation5 + $0x50] sm:$0xff]
    %v154 = vld [vmem:[#allocation5 + $0x58] sm:$0xff]
    %v155 = vld [vmem:[#allocation5 + $0x60] sm:$0xff]
    %v156 = vld [vmem:[#allocation5 + $0x68] sm:$0xff]
    %v157 = vld [vmem:[#allocation5 + $0x70] sm:$0xff]
    %v158 = vld [vmem:[#allocation5 + $0x78] sm:$0xff]
    %v159 = vld [vmem:[#allocation5 + $0x80] sm:$0xff]
    %v160 = vld [vmem:[#allocation5 + $0x88] sm:$0xff]
    %v161 = vld [vmem:[#allocation5 + $0x90] sm:$0xff]
    %v162 = vld [vmem:[#allocation5 + $0x98] sm:$0xff]
    %v163 = vld [vmem:[#allocation5 + $0xa0] sm:$0xff]
    %v164 = vld [vmem:[#allocation5 + $0xa8] sm:$0xff]
    %v165 = vld [vmem:[#allocation5 + $0xb0] sm:$0xff]
    %v166 = vld [vmem:[#allocation5 + $0xb8] sm:$0xff]
    %v167 = vld [vmem:[#allocation5 + $0xc0] sm:$0xff]
    %v168 = vld [vmem:[#allocation5 + $0xc8] sm:$0xff]
    %v169 = vld [vmem:[#allocation5 + $0xd0] sm:$0xff]
    %v170 = vld [vmem:[#allocation5 + $0xd8] sm:$0xff]
    %v171 = vld [vmem:[#allocation5 + $0xe0] sm:$0xff]
    %v172 = vld [vmem:[#allocation5 + $0xe8] sm:$0xff]
    %v173 = vld [vmem:[#allocation5 + $0xf0] sm:$0xff]
    %v174 = vld [vmem:[#allocation5 + $0xf8] sm:$0xff]
    %v175 = vld [vmem:[#allocation5 + $0x100] sm:$0xff]
    %v176 = vld [vmem:[#allocation5 + $0x108] sm:$0xff]
    %v177 = vld [vmem:[#allocation5 + $0x110] sm:$0xff]
    %v178 = vld [vmem:[#allocation5 + $0x118] sm:$0xff]
    %v179 = vld [vmem:[#allocation5 + $0x120] sm:$0xff]
    %v180 = vld [vmem:[#allocation5 + $0x128] sm:$0xff]
    %v181 = vld [vmem:[#allocation5 + $0x130] sm:$0xff]
    %v182 = vld [vmem:[#allocation5 + $0x138] sm:$0xff]
    %v183 = vld [vmem:[#allocation5 + $0x140] sm:$0xff]
    %v184 = vld [vmem:[#allocation5 + $0x148] sm:$0xff]
    %v185 = vld [vmem:[#allocation5 + $0x150] sm:$0xff]
    %v186 = vld [vmem:[#allocation5 + $0x158] sm:$0xff]
    %v187 = vld [vmem:[#allocation5 + $0x160] sm:$0xff]
    %v188 = vld [vmem:[#allocation5 + $0x168] sm:$0xff]
    %v189 = vld [vmem:[#allocation5 + $0x170] sm:$0xff]
    %v190 = vld [vmem:[#allocation5 + $0x178] sm:$0xff]
    %v191 = vld [vmem:[#allocation5 + $0x180] sm:$0xff]
    %v192 = vld [vmem:[#allocation5 + $0x188] sm:$0xff]
    %v193 = vld [vmem:[#allocation5 + $0x190] sm:$0xff]
    %v194 = vld [vmem:[#allocation5 + $0x198] sm:$0xff]
    %v195 = vld [vmem:[#allocation5 + $0x1a0] sm:$0xff]
    %v196 = vld [vmem:[#allocation5 + $0x1a8] sm:$0xff]
    %v197 = vld [vmem:[#allocation5 + $0x1b0] sm:$0xff]
    %v198 = vld [vmem:[#allocation5 + $0x1b8] sm:$0xff]
    %v199 = vld [vmem:[#allocation5 + $0x1c0] sm:$0xff]
    %v200 = vld [vmem:[#allocation5 + $0x1c8] sm:$0xff]
    %v201 = vld [vmem:[#allocation5 + $0x1d0] sm:$0xff]
    %v202 = vld [vmem:[#allocation5 + $0x1d8] sm:$0xff]
    %v203 = vld [vmem:[#allocation5 + $0x1e0] sm:$0xff]
    %v204 = vld [vmem:[#allocation5 + $0x1e8] sm:$0xff]
    %v205 = vld [vmem:[#allocation5 + $0x1f0] sm:$0xff]
    %v206 = vld [vmem:[#allocation5 + $0x1f8] sm:$0xff]
    %v207 = vld [vmem:[%s3] sm:$0xf]
    %v208 = vld [vmem:[#allocation2] sm:$0xff]
    %v209 = vld [vmem:[#allocation2 + $0x8] sm:$0xff]
    %v210 = vld [vmem:[#allocation2 + $0x10] sm:$0xff]
    %v211 = vld [vmem:[#allocation2 + $0x18] sm:$0xff]
    %v212 = vld [vmem:[#allocation2 + $0x20] sm:$0xff]
    %v213 = vld [vmem:[#allocation2 + $0x28] sm:$0xff]
    %v215 = vlaneseq
    %v216 = vshrl.u32 %v215, 7
    %v217 = vsub.s32 0, %v216
    %v218 = vrot.slane %v207, %v217
    %v219 = vlaneseq
    %v220 = vshrl.u32 %v219, 7
    %v221 = vsub.s32 1, %v220
    %v222 = vrot.slane %v207, %v221
    %v223 = vlaneseq
    %v224 = vshrl.u32 %v223, 7
    %v225 = vsub.s32 2, %v224
    %v226 = vrot.slane %v207, %v225
    %v227 = vlaneseq
    %v228 = vshrl.u32 %v227, 7
    %v229 = vsub.s32 3, %v228
    %v230 = vrot.slane %v207, %v229
    %235 = vmatprep.subr.mxu0 %v144
    %236 = vmatpush1.msra.mxu0 %v143
    %237 = vmatprep.subr.mxu0 %v148
    %238 = vmatpush1.msra.mxu0 %v147
    %239 = vmatprep.subr.mxu0 %v152
    %240 = vmatpush1.msra.mxu0 %v151
    %241 = vmatprep.subr.mxu0 %v156
    %242 = vmatpush1.msra.mxu0 %v155
    %243 = vmatprep.subr.mxu0 %v160
    %244 = vmatpush1.msra.mxu0 %v159
    %245 = vmatprep.subr.mxu0 %v164
    %246 = vmatpush1.msra.mxu0 %v163
    %247 = vmatprep.subr.mxu0 %v168
    %248 = vmatpush1.msra.mxu0 %v167
    %249 = vmatprep.subr.mxu0 %v172
    %250 = vmatpush1.msra.mxu0 %v171
    %251 = vmatprep.subr.mxu0 %v176
    %252 = vmatpush1.msra.mxu0 %v175
    %253 = vmatprep.subr.mxu0 %v180
    %254 = vmatpush1.msra.mxu0 %v179
    %255 = vmatprep.subr.mxu0 %v184
    %256 = vmatpush1.msra.mxu0 %v183
    %257 = vmatprep.subr.mxu0 %v188
    %258 = vmatpush1.msra.mxu0 %v187
    %259 = vmatprep.subr.mxu0 %v192
    %260 = vmatpush1.msra.mxu0 %v191
    %261 = vmatprep.subr.mxu0 %v196
    %262 = vmatpush1.msra.mxu0 %v195
    %263 = vmatprep.subr.mxu0 %v200
    %264 = vmatpush1.msra.mxu0 %v199
    %265 = vmatprep.subr.mxu0 %v204
    %266 = vmatpush1.msra.mxu0 %v203
    %267 = vmatprep.subr.mxu0 0.0
    %268 = vmatpush1.msra.mxu0 0.0
    %269 = vmatprep.subr.mxu0 0.0
    %270 = vmatpush1.msra.mxu0 0.0
    %271 = vmatprep.subr.mxu0 0.0
    %272 = vmatpush1.msra.mxu0 0.0
    %273 = vmatprep.subr.mxu0 0.0
    %274 = vmatpush1.msra.mxu0 0.0
    %275 = vmatprep.subr.mxu0 0.0
    %276 = vmatpush1.msra.mxu0 0.0
    %277 = vmatprep.subr.mxu0 0.0
    %278 = vmatpush1.msra.mxu0 0.0
    %279 = vmatprep.subr.mxu0 0.0
    %280 = vmatpush1.msra.mxu0 0.0
    %281 = vmatprep.subr.mxu0 0.0
    %282 = vmatpush1.msra.mxu0 0.0
    %283 = vmatprep.subr.mxu0 0.0
    %284 = vmatpush1.msra.mxu0 0.0
    %285 = vmatprep.subr.mxu0 0.0
    %286 = vmatpush1.msra.mxu0 0.0
    %287 = vmatprep.subr.mxu0 0.0
    %288 = vmatpush1.msra.mxu0 0.0
    %289 = vmatprep.subr.mxu0 0.0
    %290 = vmatpush1.msra.mxu0 0.0
    %291 = vmatprep.subr.mxu0 0.0
    %292 = vmatpush1.msra.mxu0 0.0
    %293 = vmatprep.subr.mxu0 0.0
    %294 = vmatpush1.msra.mxu0 0.0
    %295 = vmatprep.subr.mxu0 0.0
    %296 = vmatpush1.msra.mxu0 0.0
    %297 = vmatprep.subr.mxu0 0.0
    %298 = vmatpush1.msra.mxu0 0.0
    %299 = vmatprep.mubr.f32.mxu0 0.0
    %300 = vmatmul.mubr.f32.gmra.mrb[0].mxu0 %v208
    %v301 = vpop.f32.mrb[0].mxu0
    %v302 = vadd.f32 %v218, %v301
    %v303 = vpop.f32.mrb[0].mxu0
    %v304 = vadd.f32 %v222, %v303
    %305 = vmatprep.mubr.f32.mxu0 0.0
    %306 = vmatmul.mubr.f32.gmra.mrb[0].mxu0 %v209
    %v307 = vpop.f32.mrb[0].mxu0
    %v308 = vadd.f32 %v218, %v307
    %v309 = vpop.f32.mrb[0].mxu0
    %v310 = vadd.f32 %v222, %v309
    %311 = vmatprep.mubr.f32.mxu0 0.0
    %312 = vmatmul.mubr.f32.gmra.mrb[0].mxu0 %v210
    %v313 = vpop.f32.mrb[0].mxu0
    %v314 = vadd.f32 %v218, %v313
    %v315 = vpop.f32.mrb[0].mxu0
    %v316 = vadd.f32 %v222, %v315
    %317 = vmatprep.mubr.f32.mxu0 0.0
    %318 = vmatmul.mubr.f32.gmra.mrb[0].mxu0 %v211
    %v319 = vpop.f32.mrb[0].mxu0
    %v320 = vadd.f32 %v218, %v319
    %v321 = vpop.f32.mrb[0].mxu0
    %v322 = vadd.f32 %v222, %v321
    %323 = vmatprep.mubr.f32.mxu0 0.0
    %324 = vmatmul.mubr.f32.gmra.mrb[0].mxu0 %v212
    %v325 = vpop.f32.mrb[0].mxu0
    %v326 = vadd.f32 %v218, %v325
    %v327 = vpop.f32.mrb[0].mxu0
    %v328 = vadd.f32 %v222, %v327
    %329 = vmatprep.mubr.f32.mxu0 0.0
    %330 = vmatmul.mubr.f32.gmra.mrb[0].mxu0 %v213
    %v331 = vpop.f32.mrb[0].mxu0
    %v332 = vadd.f32 %v218, %v331
    %v333 = vpop.f32.mrb[0].mxu0
    %v334 = vadd.f32 %v222, %v333
    %335 = vdwg.mxu0
    %336 = vmatprep.subr.mxu0 %v146
    %337 = vmatpush1.msra.mxu0 %v145
    %338 = vmatprep.subr.mxu0 %v150
    %339 = vmatpush1.msra.mxu0 %v149
    %340 = vmatprep.subr.mxu0 %v154
    %341 = vmatpush1.msra.mxu0 %v153
    %342 = vmatprep.subr.mxu0 %v158
    %343 = vmatpush1.msra.mxu0 %v157
    %344 = vmatprep.subr.mxu0 %v162
    %345 = vmatpush1.msra.mxu0 %v161
    %346 = vmatprep.subr.mxu0 %v166
    %347 = vmatpush1.msra.mxu0 %v165
    %348 = vmatprep.subr.mxu0 %v170
    %349 = vmatpush1.msra.mxu0 %v169
    %350 = vmatprep.subr.mxu0 %v174
    %351 = vmatpush1.msra.mxu0 %v173
    %352 = vmatprep.subr.mxu0 %v178
    %353 = vmatpush1.msra.mxu0 %v177
    %354 = vmatprep.subr.mxu0 %v182
    %355 = vmatpush1.msra.mxu0 %v181
    %356 = vmatprep.subr.mxu0 %v186
    %357 = vmatpush1.msra.mxu0 %v185
    %358 = vmatprep.subr.mxu0 %v190
    %359 = vmatpush1.msra.mxu0 %v189
    %360 = vmatprep.subr.mxu0 %v194
    %361 = vmatpush1.msra.mxu0 %v193
    %362 = vmatprep.subr.mxu0 %v198
    %363 = vmatpush1.msra.mxu0 %v197
    %364 = vmatprep.subr.mxu0 %v202
    %365 = vmatpush1.msra.mxu0 %v201
    %366 = vmatprep.subr.mxu0 %v206
    %367 = vmatpush1.msra.mxu0 %v205
    %368 = vmatprep.subr.mxu0 0.0
    %369 = vmatpush1.msra.mxu0 0.0
    %370 = vmatprep.subr.mxu0 0.0
    %371 = vmatpush1.msra.mxu0 0.0
    %372 = vmatprep.subr.mxu0 0.0
    %373 = vmatpush1.msra.mxu0 0.0
    %374 = vmatprep.subr.mxu0 0.0
    %375 = vmatpush1.msra.mxu0 0.0
    %376 = vmatprep.subr.mxu0 0.0
    %377 = vmatpush1.msra.mxu0 0.0
    %378 = vmatprep.subr.mxu0 0.0
    %379 = vmatpush1.msra.mxu0 0.0
    %380 = vmatprep.subr.mxu0 0.0
    %381 = vmatpush1.msra.mxu0 0.0
    %382 = vmatprep.subr.mxu0 0.0
    %383 = vmatpush1.msra.mxu0 0.0
    %384 = vmatprep.subr.mxu0 0.0
    %385 = vmatpush1.msra.mxu0 0.0
    %386 = vmatprep.subr.mxu0 0.0
    %387 = vmatpush1.msra.mxu0 0.0
    %388 = vmatprep.subr.mxu0 0.0
    %389 = vmatpush1.msra.mxu0 0.0
    %390 = vmatprep.subr.mxu0 0.0
    %391 = vmatpush1.msra.mxu0 0.0
    %392 = vmatprep.subr.mxu0 0.0
    %393 = vmatpush1.msra.mxu0 0.0
    %394 = vmatprep.subr.mxu0 0.0
    %395 = vmatpush1.msra.mxu0 0.0
    %396 = vmatprep.subr.mxu0 0.0
    %397 = vmatpush1.msra.mxu0 0.0
    %398 = vmatprep.subr.mxu0 0.0
    %399 = vmatpush1.msra.mxu0 0.0
    %400 = vmatprep.mubr.f32.mxu0 0.0
    %401 = vmatmul.mubr.f32.gmra.mrb[0].mxu0 %v208
    %v402 = vpop.f32.mrb[0].mxu0
    %v403 = vadd.f32 %v226, %v402
    %v404 = vpop.f32.mrb[0].mxu0
    %v405 = vadd.f32 %v230, %v404
    %406 = vmatprep.mubr.f32.mxu0 0.0
    %407 = vmatmul.mubr.f32.gmra.mrb[0].mxu0 %v209
    %v408 = vpop.f32.mrb[0].mxu0
    %v409 = vadd.f32 %v226, %v408
    %v410 = vpop.f32.mrb[0].mxu0
    %v411 = vadd.f32 %v230, %v410
    %412 = vmatprep.mubr.f32.mxu0 0.0
    %413 = vmatmul.mubr.f32.gmra.mrb[0].mxu0 %v210
    %v414 = vpop.f32.mrb[0].mxu0
    %v415 = vadd.f32 %v226, %v414
    %v416 = vpop.f32.mrb[0].mxu0
    %v417 = vadd.f32 %v230, %v416
    %418 = vmatprep.mubr.f32.mxu0 0.0
    %419 = vmatmul.mubr.f32.gmra.mrb[0].mxu0 %v211
    %v420 = vpop.f32.mrb[0].mxu0
    %v421 = vadd.f32 %v226, %v420
    %v422 = vpop.f32.mrb[0].mxu0
    %v423 = vadd.f32 %v230, %v422
    %424 = vmatprep.mubr.f32.mxu0 0.0
    %425 = vmatmul.mubr.f32.gmra.mrb[0].mxu0 %v212
    %v426 = vpop.f32.mrb[0].mxu0
    %v427 = vadd.f32 %v226, %v426
    %v428 = vpop.f32.mrb[0].mxu0
    %v429 = vadd.f32 %v230, %v428
    %430 = vmatprep.mubr.f32.mxu0 0.0
    %431 = vmatmul.mubr.f32.gmra.mrb[0].mxu0 %v213
    %v432 = vpop.f32.mrb[0].mxu0
    %v433 = vadd.f32 %v226, %v432
    %v434 = vpop.f32.mrb[0].mxu0
    %v435 = vadd.f32 %v230, %v434
    %436 = vdwg.mxu0
    %437 = vmatprep.subr.mxu0 %v80
    %438 = vmatpush1.msra.mxu0 %v79
    %439 = vmatprep.subr.mxu0 %v84
    %440 = vmatpush1.msra.mxu0 %v83
    %441 = vmatprep.subr.mxu0 %v88
    %442 = vmatpush1.msra.mxu0 %v87
    %443 = vmatprep.subr.mxu0 %v92
    %444 = vmatpush1.msra.mxu0 %v91
    %445 = vmatprep.subr.mxu0 %v96
    %446 = vmatpush1.msra.mxu0 %v95
    %447 = vmatprep.subr.mxu0 %v100
    %448 = vmatpush1.msra.mxu0 %v99
    %449 = vmatprep.subr.mxu0 %v104
    %450 = vmatpush1.msra.mxu0 %v103
    %451 = vmatprep.subr.mxu0 %v108
    %452 = vmatpush1.msra.mxu0 %v107
    %453 = vmatprep.subr.mxu0 %v112
    %454 = vmatpush1.msra.mxu0 %v111
    %455 = vmatprep.subr.mxu0 %v116
    %456 = vmatpush1.msra.mxu0 %v115
    %457 = vmatprep.subr.mxu0 %v120
    %458 = vmatpush1.msra.mxu0 %v119
    %459 = vmatprep.subr.mxu0 %v124
    %460 = vmatpush1.msra.mxu0 %v123
    %461 = vmatprep.subr.mxu0 %v128
    %462 = vmatpush1.msra.mxu0 %v127
    %463 = vmatprep.subr.mxu0 %v132
    %464 = vmatpush1.msra.mxu0 %v131
    %465 = vmatprep.subr.mxu0 %v136
    %466 = vmatpush1.msra.mxu0 %v135
    %467 = vmatprep.subr.mxu0 %v140
    %468 = vmatpush1.msra.mxu0 %v139
    %469 = vmatprep.subr.mxu0 0.0
    %470 = vmatpush1.msra.mxu0 0.0
    %471 = vmatprep.subr.mxu0 0.0
    %472 = vmatpush1.msra.mxu0 0.0
    %473 = vmatprep.subr.mxu0 0.0
    %474 = vmatpush1.msra.mxu0 0.0
    %475 = vmatprep.subr.mxu0 0.0
    %476 = vmatpush1.msra.mxu0 0.0
    %477 = vmatprep.subr.mxu0 0.0
    %478 = vmatpush1.msra.mxu0 0.0
    %479 = vmatprep.subr.mxu0 0.0
    %480 = vmatpush1.msra.mxu0 0.0
    %481 = vmatprep.subr.mxu0 0.0
    %482 = vmatpush1.msra.mxu0 0.0
    %483 = vmatprep.subr.mxu0 0.0
    %484 = vmatpush1.msra.mxu0 0.0
    %485 = vmatprep.subr.mxu0 0.0
    %486 = vmatpush1.msra.mxu0 0.0
    %487 = vmatprep.subr.mxu0 0.0
    %488 = vmatpush1.msra.mxu0 0.0
    %489 = vmatprep.subr.mxu0 0.0
    %490 = vmatpush1.msra.mxu0 0.0
    %491 = vmatprep.subr.mxu0 0.0
    %492 = vmatpush1.msra.mxu0 0.0
    %493 = vmatprep.subr.mxu0 0.0
    %494 = vmatpush1.msra.mxu0 0.0
    %495 = vmatprep.subr.mxu0 0.0
    %496 = vmatpush1.msra.mxu0 0.0
    %497 = vmatprep.subr.mxu0 0.0
    %498 = vmatpush1.msra.mxu0 0.0
    %499 = vmatprep.subr.mxu0 0.0
    %500 = vmatpush1.msra.mxu0 0.0
    %501 = vmatprep.mubr.f32.mxu0 0.0
    %502 = vmatmul.mubr.f32.gmra.mrb[0].mxu0 0.0
    %v503 = vpop.f32.mrb[0].mxu0
    %v504 = vadd.f32 0.0, %v503
    %v505 = vpop.f32.mrb[0].mxu0
    %v506 = vadd.f32 0.0, %v505
    %507 = vdwg.mxu0
    %508 = vmatprep.subr.mxu0 %v82
    %509 = vmatpush1.msra.mxu0 %v81
    %510 = vmatprep.subr.mxu0 %v86
    %511 = vmatpush1.msra.mxu0 %v85
    %512 = vmatprep.subr.mxu0 %v90
    %513 = vmatpush1.msra.mxu0 %v89
    %514 = vmatprep.subr.mxu0 %v94
    %515 = vmatpush1.msra.mxu0 %v93
    %516 = vmatprep.subr.mxu0 %v98
    %517 = vmatpush1.msra.mxu0 %v97
    %518 = vmatprep.subr.mxu0 %v102
    %519 = vmatpush1.msra.mxu0 %v101
    %520 = vmatprep.subr.mxu0 %v106
    %521 = vmatpush1.msra.mxu0 %v105
    %522 = vmatprep.subr.mxu0 %v110
    %523 = vmatpush1.msra.mxu0 %v109
    %524 = vmatprep.subr.mxu0 %v114
    %525 = vmatpush1.msra.mxu0 %v113
    %526 = vmatprep.subr.mxu0 %v118
    %527 = vmatpush1.msra.mxu0 %v117
    %528 = vmatprep.subr.mxu0 %v122
    %529 = vmatpush1.msra.mxu0 %v121
    %530 = vmatprep.subr.mxu0 %v126
    %531 = vmatpush1.msra.mxu0 %v125
    %532 = vmatprep.subr.mxu0 %v130
    %533 = vmatpush1.msra.mxu0 %v129
    %534 = vmatprep.subr.mxu0 %v134
    %535 = vmatpush1.msra.mxu0 %v133
    %536 = vmatprep.subr.mxu0 %v138
    %537 = vmatpush1.msra.mxu0 %v137
    %538 = vmatprep.subr.mxu0 %v142
    %539 = vmatpush1.msra.mxu0 %v141
    %540 = vmatprep.subr.mxu0 0.0
    %541 = vmatpush1.msra.mxu0 0.0
    %542 = vmatprep.subr.mxu0 0.0
    %543 = vmatpush1.msra.mxu0 0.0
    %544 = vmatprep.subr.mxu0 0.0
    %545 = vmatpush1.msra.mxu0 0.0
    %546 = vmatprep.subr.mxu0 0.0
    %547 = vmatpush1.msra.mxu0 0.0
    %548 = vmatprep.subr.mxu0 0.0
    %549 = vmatpush1.msra.mxu0 0.0
    %550 = vmatprep.subr.mxu0 0.0
    %551 = vmatpush1.msra.mxu0 0.0
    %552 = vmatprep.subr.mxu0 0.0
    %553 = vmatpush1.msra.mxu0 0.0
    %554 = vmatprep.subr.mxu0 0.0
    %555 = vmatpush1.msra.mxu0 0.0
    %556 = vmatprep.subr.mxu0 0.0
    %557 = vmatpush1.msra.mxu0 0.0
    %558 = vmatprep.subr.mxu0 0.0
    %559 = vmatpush1.msra.mxu0 0.0
    %560 = vmatprep.subr.mxu0 0.0
    %561 = vmatpush1.msra.mxu0 0.0
    %562 = vmatprep.subr.mxu0 0.0
    %563 = vmatpush1.msra.mxu0 0.0
    %564 = vmatprep.subr.mxu0 0.0
    %565 = vmatpush1.msra.mxu0 0.0
    %566 = vmatprep.subr.mxu0 0.0
    %567 = vmatpush1.msra.mxu0 0.0
    %568 = vmatprep.subr.mxu0 0.0
    %569 = vmatpush1.msra.mxu0 0.0
    %570 = vmatprep.subr.mxu0 0.0
    %571 = vmatpush1.msra.mxu0 0.0
    %572 = vmatprep.mubr.f32.mxu0 0.0
    %573 = vmatmul.mubr.f32.gmra.mrb[0].mxu0 0.0
    %v574 = vpop.f32.mrb[0].mxu0
    %v575 = vadd.f32 0.0, %v574
    %v576 = vpop.f32.mrb[0].mxu0
    %v577 = vadd.f32 0.0, %v576
    %578 = vdwg.mxu0
    %v579 = vadd.f32 %v302, %v504
    %v580 = vadd.f32 %v304, %v506
    %v581 = vadd.f32 %v403, %v575
    %v582 = vadd.f32 %v405, %v577
    %v583 = vxor.u32 %v579, 2147483648
    %v584 = vmul.f32 %v583, 1.442695
    %v585 = vpow.pop %v584
    %v586 = vadd.f32 %v585, 1.0
    %v587 = vrcp.pop %v586
    %v588 = vmul.f32 1.0, %v587
    %v589 = vxor.u32 %v580, 2147483648
    %v590 = vmul.f32 %v589, 1.442695
    %v591 = vpow.pop %v590
    %v592 = vadd.f32 %v591, 1.0
    %v593 = vrcp.pop %v592
    %v594 = vmul.f32 1.0, %v593
    %v595 = vtanh.pop %v581
    %v596 = vxor.u32 %v582, 2147483648
    %v597 = vmul.f32 %v596, 1.442695
    %v598 = vpow.pop %v597
    %v599 = vadd.f32 %v598, 1.0
    %v600 = vrcp.pop %v599
    %v601 = vmul.f32 1.0, %v600
    %v602 = vmul.f32 %v594, 0.0
    %v603 = vmul.f32 %v588, %v595
    %v604 = vadd.f32 %v602, %v603
    %v605 = vtanh.pop %v604
    %v606 = vmul.f32 %v601, %v605
    %607 = vmatprep.subr.mxu0 %v80
    %608 = vmatpush1.msra.mxu0 %v79
    %609 = vmatprep.subr.mxu0 %v84
    %610 = vmatpush1.msra.mxu0 %v83
    %611 = vmatprep.subr.mxu0 %v88
    %612 = vmatpush1.msra.mxu0 %v87
    %613 = vmatprep.subr.mxu0 %v92
    %614 = vmatpush1.msra.mxu0 %v91
    %615 = vmatprep.subr.mxu0 %v96
    %616 = vmatpush1.msra.mxu0 %v95
    %617 = vmatprep.subr.mxu0 %v100
    %618 = vmatpush1.msra.mxu0 %v99
    %619 = vmatprep.subr.mxu0 %v104
    %620 = vmatpush1.msra.mxu0 %v103
    %621 = vmatprep.subr.mxu0 %v108
    %622 = vmatpush1.msra.mxu0 %v107
    %623 = vmatprep.subr.mxu0 %v112
    %624 = vmatpush1.msra.mxu0 %v111
    %625 = vmatprep.subr.mxu0 %v116
    %626 = vmatpush1.msra.mxu0 %v115
    %627 = vmatprep.subr.mxu0 %v120
    %628 = vmatpush1.msra.mxu0 %v119
    %629 = vmatprep.subr.mxu0 %v124
    %630 = vmatpush1.msra.mxu0 %v123
    %631 = vmatprep.subr.mxu0 %v128
    %632 = vmatpush1.msra.mxu0 %v127
    %633 = vmatprep.subr.mxu0 %v132
    %634 = vmatpush1.msra.mxu0 %v131
    %635 = vmatprep.subr.mxu0 %v136
    %636 = vmatpush1.msra.mxu0 %v135
    %637 = vmatprep.subr.mxu0 %v140
    %638 = vmatpush1.msra.mxu0 %v139
    %639 = vmatprep.subr.mxu0 0.0
    %640 = vmatpush1.msra.mxu0 0.0
    %641 = vmatprep.subr.mxu0 0.0
    %642 = vmatpush1.msra.mxu0 0.0
    %643 = vmatprep.subr.mxu0 0.0
    %644 = vmatpush1.msra.mxu0 0.0
    %645 = vmatprep.subr.mxu0 0.0
    %646 = vmatpush1.msra.mxu0 0.0
    %647 = vmatprep.subr.mxu0 0.0
    %648 = vmatpush1.msra.mxu0 0.0
    %649 = vmatprep.subr.mxu0 0.0
    %650 = vmatpush1.msra.mxu0 0.0
    %651 = vmatprep.subr.mxu0 0.0
    %652 = vmatpush1.msra.mxu0 0.0
    %653 = vmatprep.subr.mxu0 0.0
    %654 = vmatpush1.msra.mxu0 0.0
    %655 = vmatprep.subr.mxu0 0.0
    %656 = vmatpush1.msra.mxu0 0.0
    %657 = vmatprep.subr.mxu0 0.0
    %658 = vmatpush1.msra.mxu0 0.0
    %659 = vmatprep.subr.mxu0 0.0
    %660 = vmatpush1.msra.mxu0 0.0
    %661 = vmatprep.subr.mxu0 0.0
    %662 = vmatpush1.msra.mxu0 0.0
    %663 = vmatprep.subr.mxu0 0.0
    %664 = vmatpush1.msra.mxu0 0.0
    %665 = vmatprep.subr.mxu0 0.0
    %666 = vmatpush1.msra.mxu0 0.0
    %667 = vmatprep.subr.mxu0 0.0
    %668 = vmatpush1.msra.mxu0 0.0
    %669 = vmatprep.subr.mxu0 0.0
    %670 = vmatpush1.msra.mxu0 0.0
    %671 = vmatprep.mubr.f32.mxu0 0.0
    %672 = vmatmul.mubr.f32.gmra.mrb[0].mxu0 %v606
    %v673 = vpop.f32.mrb[0].mxu0
    %v674 = vadd.f32 0.0, %v673
    %v675 = vpop.f32.mrb[0].mxu0
    %v676 = vadd.f32 0.0, %v675
    %677 = vdwg.mxu0
    %678 = vmatprep.subr.mxu0 %v82
    %679 = vmatpush1.msra.mxu0 %v81
    %680 = vmatprep.subr.mxu0 %v86
    %681 = vmatpush1.msra.mxu0 %v85
    %682 = vmatprep.subr.mxu0 %v90
    %683 = vmatpush1.msra.mxu0 %v89
    %684 = vmatprep.subr.mxu0 %v94
    %685 = vmatpush1.msra.mxu0 %v93
    %686 = vmatprep.subr.mxu0 %v98
    %687 = vmatpush1.msra.mxu0 %v97
    %688 = vmatprep.subr.mxu0 %v102
    %689 = vmatpush1.msra.mxu0 %v101
    %690 = vmatprep.subr.mxu0 %v106
    %691 = vmatpush1.msra.mxu0 %v105
    %692 = vmatprep.subr.mxu0 %v110
    %693 = vmatpush1.msra.mxu0 %v109
    %694 = vmatprep.subr.mxu0 %v114
    %695 = vmatpush1.msra.mxu0 %v113
    %696 = vmatprep.subr.mxu0 %v118
    %697 = vmatpush1.msra.mxu0 %v117
    %698 = vmatprep.subr.mxu0 %v122
    %699 = vmatpush1.msra.mxu0 %v121
    %700 = vmatprep.subr.mxu0 %v126
    %701 = vmatpush1.msra.mxu0 %v125
    %702 = vmatprep.subr.mxu0 %v130
    %703 = vmatpush1.msra.mxu0 %v129
    %704 = vmatprep.subr.mxu0 %v134
    %705 = vmatpush1.msra.mxu0 %v133
    %706 = vmatprep.subr.mxu0 %v138
    %707 = vmatpush1.msra.mxu0 %v137
    %708 = vmatprep.subr.mxu0 %v142
    %709 = vmatpush1.msra.mxu0 %v141
    %710 = vmatprep.subr.mxu0 0.0
    %711 = vmatpush1.msra.mxu0 0.0
    %712 = vmatprep.subr.mxu0 0.0
    %713 = vmatpush1.msra.mxu0 0.0
    %714 = vmatprep.subr.mxu0 0.0
    %715 = vmatpush1.msra.mxu0 0.0
    %716 = vmatprep.subr.mxu0 0.0
    %717 = vmatpush1.msra.mxu0 0.0
    %718 = vmatprep.subr.mxu0 0.0
    %719 = vmatpush1.msra.mxu0 0.0
    %720 = vmatprep.subr.mxu0 0.0
    %721 = vmatpush1.msra.mxu0 0.0
    %722 = vmatprep.subr.mxu0 0.0
    %723 = vmatpush1.msra.mxu0 0.0
    %724 = vmatprep.subr.mxu0 0.0
    %725 = vmatpush1.msra.mxu0 0.0
    %726 = vmatprep.subr.mxu0 0.0
    %727 = vmatpush1.msra.mxu0 0.0
    %728 = vmatprep.subr.mxu0 0.0
    %729 = vmatpush1.msra.mxu0 0.0
    %730 = vmatprep.subr.mxu0 0.0
    %731 = vmatpush1.msra.mxu0 0.0
    %732 = vmatprep.subr.mxu0 0.0
    %733 = vmatpush1.msra.mxu0 0.0
    %734 = vmatprep.subr.mxu0 0.0
    %735 = vmatpush1.msra.mxu0 0.0
    %736 = vmatprep.subr.mxu0 0.0
    %737 = vmatpush1.msra.mxu0 0.0
    %738 = vmatprep.subr.mxu0 0.0
    %739 = vmatpush1.msra.mxu0 0.0
    %740 = vmatprep.subr.mxu0 0.0
    %741 = vmatpush1.msra.mxu0 0.0
    %742 = vmatprep.mubr.f32.mxu0 0.0
    %743 = vmatmul.mubr.f32.gmra.mrb[0].mxu0 %v606
    %v744 = vpop.f32.mrb[0].mxu0
    %v745 = vadd.f32 0.0, %v744
    %v746 = vpop.f32.mrb[0].mxu0
    %v747 = vadd.f32 0.0, %v746
    %748 = vdwg.mxu0
    %v749 = vadd.f32 %v308, %v674
    %v750 = vadd.f32 %v310, %v676
    %v751 = vadd.f32 %v409, %v745
    %v752 = vadd.f32 %v411, %v747
    %v753 = vxor.u32 %v749, 2147483648
    %v754 = vmul.f32 %v753, 1.442695
    %v755 = vpow.pop %v754
    %v756 = vadd.f32 %v755, 1.0
    %v757 = vrcp.pop %v756
    %v758 = vmul.f32 1.0, %v757
    %v759 = vxor.u32 %v750, 2147483648
    %v760 = vmul.f32 %v759, 1.442695
    %v761 = vpow.pop %v760
    %v762 = vadd.f32 %v761, 1.0
    %v763 = vrcp.pop %v762
    %v764 = vmul.f32 1.0, %v763
    %v765 = vtanh.pop %v751
    %v766 = vxor.u32 %v752, 2147483648
    %v767 = vmul.f32 %v766, 1.442695
    %v768 = vpow.pop %v767
    %v769 = vadd.f32 %v768, 1.0
    %v770 = vrcp.pop %v769
    %v771 = vmul.f32 1.0, %v770
    %v772 = vmul.f32 %v764, %v604
    %v773 = vmul.f32 %v758, %v765
    %v774 = vadd.f32 %v772, %v773
    %v775 = vtanh.pop %v774
    %v776 = vmul.f32 %v771, %v775
    %777 = vmatprep.subr.mxu0 %v80
    %778 = vmatpush1.msra.mxu0 %v79
    %779 = vmatprep.subr.mxu0 %v84
    %780 = vmatpush1.msra.mxu0 %v83
    %781 = vmatprep.subr.mxu0 %v88
    %782 = vmatpush1.msra.mxu0 %v87
    %783 = vmatprep.subr.mxu0 %v92
    %784 = vmatpush1.msra.mxu0 %v91
    %785 = vmatprep.subr.mxu0 %v96
    %786 = vmatpush1.msra.mxu0 %v95
    %787 = vmatprep.subr.mxu0 %v100
    %788 = vmatpush1.msra.mxu0 %v99
    %789 = vmatprep.subr.mxu0 %v104
    %790 = vmatpush1.msra.mxu0 %v103
    %791 = vmatprep.subr.mxu0 %v108
    %792 = vmatpush1.msra.mxu0 %v107
    %793 = vmatprep.subr.mxu0 %v112
    %794 = vmatpush1.msra.mxu0 %v111
    %795 = vmatprep.subr.mxu0 %v116
    %796 = vmatpush1.msra.mxu0 %v115
    %797 = vmatprep.subr.mxu0 %v120
    %798 = vmatpush1.msra.mxu0 %v119
    %799 = vmatprep.subr.mxu0 %v124
    %800 = vmatpush1.msra.mxu0 %v123
    %801 = vmatprep.subr.mxu0 %v128
    %802 = vmatpush1.msra.mxu0 %v127
    %803 = vmatprep.subr.mxu0 %v132
    %804 = vmatpush1.msra.mxu0 %v131
    %805 = vmatprep.subr.mxu0 %v136
    %806 = vmatpush1.msra.mxu0 %v135
    %807 = vmatprep.subr.mxu0 %v140
    %808 = vmatpush1.msra.mxu0 %v139
    %809 = vmatprep.subr.mxu0 0.0
    %810 = vmatpush1.msra.mxu0 0.0
    %811 = vmatprep.subr.mxu0 0.0
    %812 = vmatpush1.msra.mxu0 0.0
    %813 = vmatprep.subr.mxu0 0.0
    %814 = vmatpush1.msra.mxu0 0.0
    %815 = vmatprep.subr.mxu0 0.0
    %816 = vmatpush1.msra.mxu0 0.0
    %817 = vmatprep.subr.mxu0 0.0
    %818 = vmatpush1.msra.mxu0 0.0
    %819 = vmatprep.subr.mxu0 0.0
    %820 = vmatpush1.msra.mxu0 0.0
    %821 = vmatprep.subr.mxu0 0.0
    %822 = vmatpush1.msra.mxu0 0.0
    %823 = vmatprep.subr.mxu0 0.0
    %824 = vmatpush1.msra.mxu0 0.0
    %825 = vmatprep.subr.mxu0 0.0
    %826 = vmatpush1.msra.mxu0 0.0
    %827 = vmatprep.subr.mxu0 0.0
    %828 = vmatpush1.msra.mxu0 0.0
    %829 = vmatprep.subr.mxu0 0.0
    %830 = vmatpush1.msra.mxu0 0.0
    %831 = vmatprep.subr.mxu0 0.0
    %832 = vmatpush1.msra.mxu0 0.0
    %833 = vmatprep.subr.mxu0 0.0
    %834 = vmatpush1.msra.mxu0 0.0
    %835 = vmatprep.subr.mxu0 0.0
    %836 = vmatpush1.msra.mxu0 0.0
    %837 = vmatprep.subr.mxu0 0.0
    %838 = vmatpush1.msra.mxu0 0.0
    %839 = vmatprep.subr.mxu0 0.0
    %840 = vmatpush1.msra.mxu0 0.0
    %841 = vmatprep.mubr.f32.mxu0 0.0
    %842 = vmatmul.mubr.f32.gmra.mrb[0].mxu0 %v776
    %v843 = vpop.f32.mrb[0].mxu0
    %v844 = vadd.f32 0.0, %v843
    %v845 = vpop.f32.mrb[0].mxu0
    %v846 = vadd.f32 0.0, %v845
    %847 = vdwg.mxu0
    %848 = vmatprep.subr.mxu0 %v82
    %849 = vmatpush1.msra.mxu0 %v81
    %850 = vmatprep.subr.mxu0 %v86
    %851 = vmatpush1.msra.mxu0 %v85
    %852 = vmatprep.subr.mxu0 %v90
    %853 = vmatpush1.msra.mxu0 %v89
    %854 = vmatprep.subr.mxu0 %v94
    %855 = vmatpush1.msra.mxu0 %v93
    %856 = vmatprep.subr.mxu0 %v98
    %857 = vmatpush1.msra.mxu0 %v97
    %858 = vmatprep.subr.mxu0 %v102
    %859 = vmatpush1.msra.mxu0 %v101
    %860 = vmatprep.subr.mxu0 %v106
    %861 = vmatpush1.msra.mxu0 %v105
    %862 = vmatprep.subr.mxu0 %v110
    %863 = vmatpush1.msra.mxu0 %v109
    %864 = vmatprep.subr.mxu0 %v114
    %865 = vmatpush1.msra.mxu0 %v113
    %866 = vmatprep.subr.mxu0 %v118
    %867 = vmatpush1.msra.mxu0 %v117
    %868 = vmatprep.subr.mxu0 %v122
    %869 = vmatpush1.msra.mxu0 %v121
    %870 = vmatprep.subr.mxu0 %v126
    %871 = vmatpush1.msra.mxu0 %v125
    %872 = vmatprep.subr.mxu0 %v130
    %873 = vmatpush1.msra.mxu0 %v129
    %874 = vmatprep.subr.mxu0 %v134
    %875 = vmatpush1.msra.mxu0 %v133
    %876 = vmatprep.subr.mxu0 %v138
    %877 = vmatpush1.msra.mxu0 %v137
    %878 = vmatprep.subr.mxu0 %v142
    %879 = vmatpush1.msra.mxu0 %v141
    %880 = vmatprep.subr.mxu0 0.0
    %881 = vmatpush1.msra.mxu0 0.0
    %882 = vmatprep.subr.mxu0 0.0
    %883 = vmatpush1.msra.mxu0 0.0
    %884 = vmatprep.subr.mxu0 0.0
    %885 = vmatpush1.msra.mxu0 0.0
    %886 = vmatprep.subr.mxu0 0.0
    %887 = vmatpush1.msra.mxu0 0.0
    %888 = vmatprep.subr.mxu0 0.0
    %889 = vmatpush1.msra.mxu0 0.0
    %890 = vmatprep.subr.mxu0 0.0
    %891 = vmatpush1.msra.mxu0 0.0
    %892 = vmatprep.subr.mxu0 0.0
    %893 = vmatpush1.msra.mxu0 0.0
    %894 = vmatprep.subr.mxu0 0.0
    %895 = vmatpush1.msra.mxu0 0.0
    %896 = vmatprep.subr.mxu0 0.0
    %897 = vmatpush1.msra.mxu0 0.0
    %898 = vmatprep.subr.mxu0 0.0
    %899 = vmatpush1.msra.mxu0 0.0
    %900 = vmatprep.subr.mxu0 0.0
    %901 = vmatpush1.msra.mxu0 0.0
    %902 = vmatprep.subr.mxu0 0.0
    %903 = vmatpush1.msra.mxu0 0.0
    %904 = vmatprep.subr.mxu0 0.0
    %905 = vmatpush1.msra.mxu0 0.0
    %906 = vmatprep.subr.mxu0 0.0
    %907 = vmatpush1.msra.mxu0 0.0
    %908 = vmatprep.subr.mxu0 0.0
    %909 = vmatpush1.msra.mxu0 0.0
    %910 = vmatprep.subr.mxu0 0.0
    %911 = vmatpush1.msra.mxu0 0.0
    %912 = vmatprep.mubr.f32.mxu0 0.0
    %913 = vmatmul.mubr.f32.gmra.mrb[0].mxu0 %v776
    %v914 = vpop.f32.mrb[0].mxu0
    %v915 = vadd.f32 0.0, %v914
    %v916 = vpop.f32.mrb[0].mxu0
    %v917 = vadd.f32 0.0, %v916
    %918 = vdwg.mxu0
    %v919 = vadd.f32 %v314, %v844
    %v920 = vadd.f32 %v316, %v846
    %v921 = vadd.f32 %v415, %v915
    %v922 = vadd.f32 %v417, %v917
    %v923 = vxor.u32 %v919, 2147483648
    %v924 = vmul.f32 %v923, 1.442695
    %v925 = vpow.pop %v924
    %v926 = vadd.f32 %v925, 1.0
    %v927 = vrcp.pop %v926
    %v928 = vmul.f32 1.0, %v927
    %v929 = vxor.u32 %v920, 2147483648
    %v930 = vmul.f32 %v929, 1.442695
    %v931 = vpow.pop %v930
    %v932 = vadd.f32 %v931, 1.0
    %v933 = vrcp.pop %v932
    %v934 = vmul.f32 1.0, %v933
    %v935 = vtanh.pop %v921
    %v936 = vxor.u32 %v922, 2147483648
    %v937 = vmul.f32 %v936, 1.442695
    %v938 = vpow.pop %v937
    %v939 = vadd.f32 %v938, 1.0
    %v940 = vrcp.pop %v939
    %v941 = vmul.f32 1.0, %v940
    %v942 = vmul.f32 %v934, %v774
    %v943 = vmul.f32 %v928, %v935
    %v944 = vadd.f32 %v942, %v943
    %v945 = vtanh.pop %v944
    %v946 = vmul.f32 %v941, %v945
    %947 = vmatprep.subr.mxu0 %v80
    %948 = vmatpush1.msra.mxu0 %v79
    %949 = vmatprep.subr.mxu0 %v84
    %950 = vmatpush1.msra.mxu0 %v83
    %951 = vmatprep.subr.mxu0 %v88
    %952 = vmatpush1.msra.mxu0 %v87
    %953 = vmatprep.subr.mxu0 %v92
    %954 = vmatpush1.msra.mxu0 %v91
    %955 = vmatprep.subr.mxu0 %v96
    %956 = vmatpush1.msra.mxu0 %v95
    %957 = vmatprep.subr.mxu0 %v100
    %958 = vmatpush1.msra.mxu0 %v99
    %959 = vmatprep.subr.mxu0 %v104
    %960 = vmatpush1.msra.mxu0 %v103
    %961 = vmatprep.subr.mxu0 %v108
    %962 = vmatpush1.msra.mxu0 %v107
    %963 = vmatprep.subr.mxu0 %v112
    %964 = vmatpush1.msra.mxu0 %v111
    %965 = vmatprep.subr.mxu0 %v116
    %966 = vmatpush1.msra.mxu0 %v115
    %967 = vmatprep.subr.mxu0 %v120
    %968 = vmatpush1.msra.mxu0 %v119
    %969 = vmatprep.subr.mxu0 %v124
    %970 = vmatpush1.msra.mxu0 %v123
    %971 = vmatprep.subr.mxu0 %v128
    %972 = vmatpush1.msra.mxu0 %v127
    %973 = vmatprep.subr.mxu0 %v132
    %974 = vmatpush1.msra.mxu0 %v131
    %975 = vmatprep.subr.mxu0 %v136
    %976 = vmatpush1.msra.mxu0 %v135
    %977 = vmatprep.subr.mxu0 %v140
    %978 = vmatpush1.msra.mxu0 %v139
    %979 = vmatprep.subr.mxu0 0.0
    %980 = vmatpush1.msra.mxu0 0.0
    %981 = vmatprep.subr.mxu0 0.0
    %982 = vmatpush1.msra.mxu0 0.0
    %983 = vmatprep.subr.mxu0 0.0
    %984 = vmatpush1.msra.mxu0 0.0
    %985 = vmatprep.subr.mxu0 0.0
    %986 = vmatpush1.msra.mxu0 0.0
    %987 = vmatprep.subr.mxu0 0.0
    %988 = vmatpush1.msra.mxu0 0.0
    %989 = vmatprep.subr.mxu0 0.0
    %990 = vmatpush1.msra.mxu0 0.0
    %991 = vmatprep.subr.mxu0 0.0
    %992 = vmatpush1.msra.mxu0 0.0
    %993 = vmatprep.subr.mxu0 0.0
    %994 = vmatpush1.msra.mxu0 0.0
    %995 = vmatprep.subr.mxu0 0.0
    %996 = vmatpush1.msra.mxu0 0.0
    %997 = vmatprep.subr.mxu0 0.0
    %998 = vmatpush1.msra.mxu0 0.0
    %999 = vmatprep.subr.mxu0 0.0
    %1000 = vmatpush1.msra.mxu0 0.0
    %1001 = vmatprep.subr.mxu0 0.0
    %1002 = vmatpush1.msra.mxu0 0.0
    %1003 = vmatprep.subr.mxu0 0.0
    %1004 = vmatpush1.msra.mxu0 0.0
    %1005 = vmatprep.subr.mxu0 0.0
    %1006 = vmatpush1.msra.mxu0 0.0
    %1007 = vmatprep.subr.mxu0 0.0
    %1008 = vmatpush1.msra.mxu0 0.0
    %1009 = vmatprep.subr.mxu0 0.0
    %1010 = vmatpush1.msra.mxu0 0.0
    %1011 = vmatprep.mubr.f32.mxu0 0.0
    %1012 = vmatmul.mubr.f32.gmra.mrb[0].mxu0 %v946
    %v1013 = vpop.f32.mrb[0].mxu0
    %v1014 = vadd.f32 0.0, %v1013
    %v1015 = vpop.f32.mrb[0].mxu0
    %v1016 = vadd.f32 0.0, %v1015
    %1017 = vdwg.mxu0
    %1018 = vmatprep.subr.mxu0 %v82
    %1019 = vmatpush1.msra.mxu0 %v81
    %1020 = vmatprep.subr.mxu0 %v86
    %1021 = vmatpush1.msra.mxu0 %v85
    %1022 = vmatprep.subr.mxu0 %v90
    %1023 = vmatpush1.msra.mxu0 %v89
    %1024 = vmatprep.subr.mxu0 %v94
    %1025 = vmatpush1.msra.mxu0 %v93
    %1026 = vmatprep.subr.mxu0 %v98
    %1027 = vmatpush1.msra.mxu0 %v97
    %1028 = vmatprep.subr.mxu0 %v102
    %1029 = vmatpush1.msra.mxu0 %v101
    %1030 = vmatprep.subr.mxu0 %v106
    %1031 = vmatpush1.msra.mxu0 %v105
    %1032 = vmatprep.subr.mxu0 %v110
    %1033 = vmatpush1.msra.mxu0 %v109
    %1034 = vmatprep.subr.mxu0 %v114
    %1035 = vmatpush1.msra.mxu0 %v113
    %1036 = vmatprep.subr.mxu0 %v118
    %1037 = vmatpush1.msra.mxu0 %v117
    %1038 = vmatprep.subr.mxu0 %v122
    %1039 = vmatpush1.msra.mxu0 %v121
    %1040 = vmatprep.subr.mxu0 %v126
    %1041 = vmatpush1.msra.mxu0 %v125
    %1042 = vmatprep.subr.mxu0 %v130
    %1043 = vmatpush1.msra.mxu0 %v129
    %1044 = vmatprep.subr.mxu0 %v134
    %1045 = vmatpush1.msra.mxu0 %v133
    %1046 = vmatprep.subr.mxu0 %v138
    %1047 = vmatpush1.msra.mxu0 %v137
    %1048 = vmatprep.subr.mxu0 %v142
    %1049 = vmatpush1.msra.mxu0 %v141
    %1050 = vmatprep.subr.mxu0 0.0
    %1051 = vmatpush1.msra.mxu0 0.0
    %1052 = vmatprep.subr.mxu0 0.0
    %1053 = vmatpush1.msra.mxu0 0.0
    %1054 = vmatprep.subr.mxu0 0.0
    %1055 = vmatpush1.msra.mxu0 0.0
    %1056 = vmatprep.subr.mxu0 0.0
    %1057 = vmatpush1.msra.mxu0 0.0
    %1058 = vmatprep.subr.mxu0 0.0
    %1059 = vmatpush1.msra.mxu0 0.0
    %1060 = vmatprep.subr.mxu0 0.0
    %1061 = vmatpush1.msra.mxu0 0.0
    %1062 = vmatprep.subr.mxu0 0.0
    %1063 = vmatpush1.msra.mxu0 0.0
    %1064 = vmatprep.subr.mxu0 0.0
    %1065 = vmatpush1.msra.mxu0 0.0
    %1066 = vmatprep.subr.mxu0 0.0
    %1067 = vmatpush1.msra.mxu0 0.0
    %1068 = vmatprep.subr.mxu0 0.0
    %1069 = vmatpush1.msra.mxu0 0.0
    %1070 = vmatprep.subr.mxu0 0.0
    %1071 = vmatpush1.msra.mxu0 0.0
    %1072 = vmatprep.subr.mxu0 0.0
    %1073 = vmatpush1.msra.mxu0 0.0
    %1074 = vmatprep.subr.mxu0 0.0
    %1075 = vmatpush1.msra.mxu0 0.0
    %1076 = vmatprep.subr.mxu0 0.0
    %1077 = vmatpush1.msra.mxu0 0.0
    %1078 = vmatprep.subr.mxu0 0.0
    %1079 = vmatpush1.msra.mxu0 0.0
    %1080 = vmatprep.subr.mxu0 0.0
    %1081 = vmatpush1.msra.mxu0 0.0
    %1082 = vmatprep.mubr.f32.mxu0 0.0
    %1083 = vmatmul.mubr.f32.gmra.mrb[0].mxu0 %v946
    %v1084 = vpop.f32.mrb[0].mxu0
    %v1085 = vadd.f32 0.0, %v1084
    %v1086 = vpop.f32.mrb[0].mxu0
    %v1087 = vadd.f32 0.0, %v1086
    %1088 = vdwg.mxu0
    %v1089 = vadd.f32 %v320, %v1014
    %v1090 = vadd.f32 %v322, %v1016
    %v1091 = vadd.f32 %v421, %v1085
    %v1092 = vadd.f32 %v423, %v1087
    %v1093 = vxor.u32 %v1089, 2147483648
    %v1094 = vmul.f32 %v1093, 1.442695
    %v1095 = vpow.pop %v1094
    %v1096 = vadd.f32 %v1095, 1.0
    %v1097 = vrcp.pop %v1096
    %v1098 = vmul.f32 1.0, %v1097
    %v1099 = vxor.u32 %v1090, 2147483648
    %v1100 = vmul.f32 %v1099, 1.442695
    %v1101 = vpow.pop %v1100
    %v1102 = vadd.f32 %v1101, 1.0
    %v1103 = vrcp.pop %v1102
    %v1104 = vmul.f32 1.0, %v1103
    %v1105 = vtanh.pop %v1091
    %v1106 = vxor.u32 %v1092, 2147483648
    %v1107 = vmul.f32 %v1106, 1.442695
    %v1108 = vpow.pop %v1107
    %v1109 = vadd.f32 %v1108, 1.0
    %v1110 = vrcp.pop %v1109
    %v1111 = vmul.f32 1.0, %v1110
    %v1112 = vmul.f32 %v1104, %v944
    %v1113 = vmul.f32 %v1098, %v1105
    %v1114 = vadd.f32 %v1112, %v1113
    %v1115 = vtanh.pop %v1114
    %v1116 = vmul.f32 %v1111, %v1115
    %1117 = vmatprep.subr.mxu0 %v80
    %1118 = vmatpush1.msra.mxu0 %v79
    %1119 = vmatprep.subr.mxu0 %v84
    %1120 = vmatpush1.msra.mxu0 %v83
    %1121 = vmatprep.subr.mxu0 %v88
    %1122 = vmatpush1.msra.mxu0 %v87
    %1123 = vmatprep.subr.mxu0 %v92
    %1124 = vmatpush1.msra.mxu0 %v91
    %1125 = vmatprep.subr.mxu0 %v96
    %1126 = vmatpush1.msra.mxu0 %v95
    %1127 = vmatprep.subr.mxu0 %v100
    %1128 = vmatpush1.msra.mxu0 %v99
    %1129 = vmatprep.subr.mxu0 %v104
    %1130 = vmatpush1.msra.mxu0 %v103
    %1131 = vmatprep.subr.mxu0 %v108
    %1132 = vmatpush1.msra.mxu0 %v107
    %1133 = vmatprep.subr.mxu0 %v112
    %1134 = vmatpush1.msra.mxu0 %v111
    %1135 = vmatprep.subr.mxu0 %v116
    %1136 = vmatpush1.msra.mxu0 %v115
    %1137 = vmatprep.subr.mxu0 %v120
    %1138 = vmatpush1.msra.mxu0 %v119
    %1139 = vmatprep.subr.mxu0 %v124
    %1140 = vmatpush1.msra.mxu0 %v123
    %1141 = vmatprep.subr.mxu0 %v128
    %1142 = vmatpush1.msra.mxu0 %v127
    %1143 = vmatprep.subr.mxu0 %v132
    %1144 = vmatpush1.msra.mxu0 %v131
    %1145 = vmatprep.subr.mxu0 %v136
    %1146 = vmatpush1.msra.mxu0 %v135
    %1147 = vmatprep.subr.mxu0 %v140
    %1148 = vmatpush1.msra.mxu0 %v139
    %1149 = vmatprep.subr.mxu0 0.0
    %1150 = vmatpush1.msra.mxu0 0.0
    %1151 = vmatprep.subr.mxu0 0.0
    %1152 = vmatpush1.msra.mxu0 0.0
    %1153 = vmatprep.subr.mxu0 0.0
    %1154 = vmatpush1.msra.mxu0 0.0
    %1155 = vmatprep.subr.mxu0 0.0
    %1156 = vmatpush1.msra.mxu0 0.0
    %1157 = vmatprep.subr.mxu0 0.0
    %1158 = vmatpush1.msra.mxu0 0.0
    %1159 = vmatprep.subr.mxu0 0.0
    %1160 = vmatpush1.msra.mxu0 0.0
    %1161 = vmatprep.subr.mxu0 0.0
    %1162 = vmatpush1.msra.mxu0 0.0
    %1163 = vmatprep.subr.mxu0 0.0
    %1164 = vmatpush1.msra.mxu0 0.0
    %1165 = vmatprep.subr.mxu0 0.0
    %1166 = vmatpush1.msra.mxu0 0.0
    %1167 = vmatprep.subr.mxu0 0.0
    %1168 = vmatpush1.msra.mxu0 0.0
    %1169 = vmatprep.subr.mxu0 0.0
    %1170 = vmatpush1.msra.mxu0 0.0
    %1171 = vmatprep.subr.mxu0 0.0
    %1172 = vmatpush1.msra.mxu0 0.0
    %1173 = vmatprep.subr.mxu0 0.0
    %1174 = vmatpush1.msra.mxu0 0.0
    %1175 = vmatprep.subr.mxu0 0.0
    %1176 = vmatpush1.msra.mxu0 0.0
    %1177 = vmatprep.subr.mxu0 0.0
    %1178 = vmatpush1.msra.mxu0 0.0
    %1179 = vmatprep.subr.mxu0 0.0
    %1180 = vmatpush1.msra.mxu0 0.0
    %1181 = vmatprep.mubr.f32.mxu0 0.0
    %1182 = vmatmul.mubr.f32.gmra.mrb[0].mxu0 %v1116
    %v1183 = vpop.f32.mrb[0].mxu0
    %v1184 = vadd.f32 0.0, %v1183
    %v1185 = vpop.f32.mrb[0].mxu0
    %v1186 = vadd.f32 0.0, %v1185
    %1187 = vdwg.mxu0
    %1188 = vmatprep.subr.mxu0 %v82
    %1189 = vmatpush1.msra.mxu0 %v81
    %1190 = vmatprep.subr.mxu0 %v86
    %1191 = vmatpush1.msra.mxu0 %v85
    %1192 = vmatprep.subr.mxu0 %v90
    %1193 = vmatpush1.msra.mxu0 %v89
    %1194 = vmatprep.subr.mxu0 %v94
    %1195 = vmatpush1.msra.mxu0 %v93
    %1196 = vmatprep.subr.mxu0 %v98
    %1197 = vmatpush1.msra.mxu0 %v97
    %1198 = vmatprep.subr.mxu0 %v102
    %1199 = vmatpush1.msra.mxu0 %v101
    %1200 = vmatprep.subr.mxu0 %v106
    %1201 = vmatpush1.msra.mxu0 %v105
    %1202 = vmatprep.subr.mxu0 %v110
    %1203 = vmatpush1.msra.mxu0 %v109
    %1204 = vmatprep.subr.mxu0 %v114
    %1205 = vmatpush1.msra.mxu0 %v113
    %1206 = vmatprep.subr.mxu0 %v118
    %1207 = vmatpush1.msra.mxu0 %v117
    %1208 = vmatprep.subr.mxu0 %v122
    %1209 = vmatpush1.msra.mxu0 %v121
    %1210 = vmatprep.subr.mxu0 %v126
    %1211 = vmatpush1.msra.mxu0 %v125
    %1212 = vmatprep.subr.mxu0 %v130
    %1213 = vmatpush1.msra.mxu0 %v129
    %1214 = vmatprep.subr.mxu0 %v134
    %1215 = vmatpush1.msra.mxu0 %v133
    %1216 = vmatprep.subr.mxu0 %v138
    %1217 = vmatpush1.msra.mxu0 %v137
    %1218 = vmatprep.subr.mxu0 %v142
    %1219 = vmatpush1.msra.mxu0 %v141
    %1220 = vmatprep.subr.mxu0 0.0
    %1221 = vmatpush1.msra.mxu0 0.0
    %1222 = vmatprep.subr.mxu0 0.0
    %1223 = vmatpush1.msra.mxu0 0.0
    %1224 = vmatprep.subr.mxu0 0.0
    %1225 = vmatpush1.msra.mxu0 0.0
    %1226 = vmatprep.subr.mxu0 0.0
    %1227 = vmatpush1.msra.mxu0 0.0
    %1228 = vmatprep.subr.mxu0 0.0
    %1229 = vmatpush1.msra.mxu0 0.0
    %1230 = vmatprep.subr.mxu0 0.0
    %1231 = vmatpush1.msra.mxu0 0.0
    %1232 = vmatprep.subr.mxu0 0.0
    %1233 = vmatpush1.msra.mxu0 0.0
    %1234 = vmatprep.subr.mxu0 0.0
    %1235 = vmatpush1.msra.mxu0 0.0
    %1236 = vmatprep.subr.mxu0 0.0
    %1237 = vmatpush1.msra.mxu0 0.0
    %1238 = vmatprep.subr.mxu0 0.0
    %1239 = vmatpush1.msra.mxu0 0.0
    %1240 = vmatprep.subr.mxu0 0.0
    %1241 = vmatpush1.msra.mxu0 0.0
    %1242 = vmatprep.subr.mxu0 0.0
    %1243 = vmatpush1.msra.mxu0 0.0
    %1244 = vmatprep.subr.mxu0 0.0
    %1245 = vmatpush1.msra.mxu0 0.0
    %1246 = vmatprep.subr.mxu0 0.0
    %1247 = vmatpush1.msra.mxu0 0.0
    %1248 = vmatprep.subr.mxu0 0.0
    %1249 = vmatpush1.msra.mxu0 0.0
    %1250 = vmatprep.subr.mxu0 0.0
    %1251 = vmatpush1.msra.mxu0 0.0
    %1252 = vmatprep.mubr.f32.mxu0 0.0
    %1253 = vmatmul.mubr.f32.gmra.mrb[0].mxu0 %v1116
    %v1254 = vpop.f32.mrb[0].mxu0
    %v1255 = vadd.f32 0.0, %v1254
    %v1256 = vpop.f32.mrb[0].mxu0
    %v1257 = vadd.f32 0.0, %v1256
    %1258 = vdwg.mxu0
    %v1259 = vadd.f32 %v326, %v1184
    %v1260 = vadd.f32 %v328, %v1186
    %v1261 = vadd.f32 %v427, %v1255
    %v1262 = vadd.f32 %v429, %v1257
    %v1263 = vxor.u32 %v1259, 2147483648
    %v1264 = vmul.f32 %v1263, 1.442695
    %v1265 = vpow.pop %v1264
    %v1266 = vadd.f32 %v1265, 1.0
    %v1267 = vrcp.pop %v1266
    %v1268 = vmul.f32 1.0, %v1267
    %v1269 = vxor.u32 %v1260, 2147483648
    %v1270 = vmul.f32 %v1269, 1.442695
    %v1271 = vpow.pop %v1270
    %v1272 = vadd.f32 %v1271, 1.0
    %v1273 = vrcp.pop %v1272
    %v1274 = vmul.f32 1.0, %v1273
    %v1275 = vtanh.pop %v1261
    %v1276 = vxor.u32 %v1262, 2147483648
    %v1277 = vmul.f32 %v1276, 1.442695
    %v1278 = vpow.pop %v1277
    %v1279 = vadd.f32 %v1278, 1.0
    %v1280 = vrcp.pop %v1279
    %v1281 = vmul.f32 1.0, %v1280
    %v1282 = vmul.f32 %v1274, %v1114
    %v1283 = vmul.f32 %v1268, %v1275
    %v1284 = vadd.f32 %v1282, %v1283
    %v1285 = vtanh.pop %v1284
    %v1286 = vmul.f32 %v1281, %v1285
    %1287 = vmatprep.subr.mxu0 %v80
    %1288 = vmatpush1.msra.mxu0 %v79
    %1289 = vmatprep.subr.mxu0 %v84
    %1290 = vmatpush1.msra.mxu0 %v83
    %1291 = vmatprep.subr.mxu0 %v88
    %1292 = vmatpush1.msra.mxu0 %v87
    %1293 = vmatprep.subr.mxu0 %v92
    %1294 = vmatpush1.msra.mxu0 %v91
    %1295 = vmatprep.subr.mxu0 %v96
    %1296 = vmatpush1.msra.mxu0 %v95
    %1297 = vmatprep.subr.mxu0 %v100
    %1298 = vmatpush1.msra.mxu0 %v99
    %1299 = vmatprep.subr.mxu0 %v104
    %1300 = vmatpush1.msra.mxu0 %v103
    %1301 = vmatprep.subr.mxu0 %v108
    %1302 = vmatpush1.msra.mxu0 %v107
    %1303 = vmatprep.subr.mxu0 %v112
    %1304 = vmatpush1.msra.mxu0 %v111
    %1305 = vmatprep.subr.mxu0 %v116
    %1306 = vmatpush1.msra.mxu0 %v115
    %1307 = vmatprep.subr.mxu0 %v120
    %1308 = vmatpush1.msra.mxu0 %v119
    %1309 = vmatprep.subr.mxu0 %v124
    %1310 = vmatpush1.msra.mxu0 %v123
    %1311 = vmatprep.subr.mxu0 %v128
    %1312 = vmatpush1.msra.mxu0 %v127
    %1313 = vmatprep.subr.mxu0 %v132
    %1314 = vmatpush1.msra.mxu0 %v131
    %1315 = vmatprep.subr.mxu0 %v136
    %1316 = vmatpush1.msra.mxu0 %v135
    %1317 = vmatprep.subr.mxu0 %v140
    %1318 = vmatpush1.msra.mxu0 %v139
    %1319 = vmatprep.subr.mxu0 0.0
    %1320 = vmatpush1.msra.mxu0 0.0
    %1321 = vmatprep.subr.mxu0 0.0
    %1322 = vmatpush1.msra.mxu0 0.0
    %1323 = vmatprep.subr.mxu0 0.0
    %1324 = vmatpush1.msra.mxu0 0.0
    %1325 = vmatprep.subr.mxu0 0.0
    %1326 = vmatpush1.msra.mxu0 0.0
    %1327 = vmatprep.subr.mxu0 0.0
    %1328 = vmatpush1.msra.mxu0 0.0
    %1329 = vmatprep.subr.mxu0 0.0
    %1330 = vmatpush1.msra.mxu0 0.0
    %1331 = vmatprep.subr.mxu0 0.0
    %1332 = vmatpush1.msra.mxu0 0.0
    %1333 = vmatprep.subr.mxu0 0.0
    %1334 = vmatpush1.msra.mxu0 0.0
    %1335 = vmatprep.subr.mxu0 0.0
    %1336 = vmatpush1.msra.mxu0 0.0
    %1337 = vmatprep.subr.mxu0 0.0
    %1338 = vmatpush1.msra.mxu0 0.0
    %1339 = vmatprep.subr.mxu0 0.0
    %1340 = vmatpush1.msra.mxu0 0.0
    %1341 = vmatprep.subr.mxu0 0.0
    %1342 = vmatpush1.msra.mxu0 0.0
    %1343 = vmatprep.subr.mxu0 0.0
    %1344 = vmatpush1.msra.mxu0 0.0
    %1345 = vmatprep.subr.mxu0 0.0
    %1346 = vmatpush1.msra.mxu0 0.0
    %1347 = vmatprep.subr.mxu0 0.0
    %1348 = vmatpush1.msra.mxu0 0.0
    %1349 = vmatprep.subr.mxu0 0.0
    %1350 = vmatpush1.msra.mxu0 0.0
    %1351 = vmatprep.mubr.f32.mxu0 0.0
    %1352 = vmatmul.mubr.f32.gmra.mrb[0].mxu0 %v1286
    %v1353 = vpop.f32.mrb[0].mxu0
    %v1354 = vadd.f32 0.0, %v1353
    %v1355 = vpop.f32.mrb[0].mxu0
    %v1356 = vadd.f32 0.0, %v1355
    %1357 = vdwg.mxu0
    %1358 = vmatprep.subr.mxu0 %v82
    %1359 = vmatpush1.msra.mxu0 %v81
    %1360 = vmatprep.subr.mxu0 %v86
    %1361 = vmatpush1.msra.mxu0 %v85
    %1362 = vmatprep.subr.mxu0 %v90
    %1363 = vmatpush1.msra.mxu0 %v89
    %1364 = vmatprep.subr.mxu0 %v94
    %1365 = vmatpush1.msra.mxu0 %v93
    %1366 = vmatprep.subr.mxu0 %v98
    %1367 = vmatpush1.msra.mxu0 %v97
    %1368 = vmatprep.subr.mxu0 %v102
    %1369 = vmatpush1.msra.mxu0 %v101
    %1370 = vmatprep.subr.mxu0 %v106
    %1371 = vmatpush1.msra.mxu0 %v105
    %1372 = vmatprep.subr.mxu0 %v110
    %1373 = vmatpush1.msra.mxu0 %v109
    %1374 = vmatprep.subr.mxu0 %v114
    %1375 = vmatpush1.msra.mxu0 %v113
    %1376 = vmatprep.subr.mxu0 %v118
    %1377 = vmatpush1.msra.mxu0 %v117
    %1378 = vmatprep.subr.mxu0 %v122
    %1379 = vmatpush1.msra.mxu0 %v121
    %1380 = vmatprep.subr.mxu0 %v126
    %1381 = vmatpush1.msra.mxu0 %v125
    %1382 = vmatprep.subr.mxu0 %v130
    %1383 = vmatpush1.msra.mxu0 %v129
    %1384 = vmatprep.subr.mxu0 %v134
    %1385 = vmatpush1.msra.mxu0 %v133
    %1386 = vmatprep.subr.mxu0 %v138
    %1387 = vmatpush1.msra.mxu0 %v137
    %1388 = vmatprep.subr.mxu0 %v142
    %1389 = vmatpush1.msra.mxu0 %v141
    %1390 = vmatprep.subr.mxu0 0.0
    %1391 = vmatpush1.msra.mxu0 0.0
    %1392 = vmatprep.subr.mxu0 0.0
    %1393 = vmatpush1.msra.mxu0 0.0
    %1394 = vmatprep.subr.mxu0 0.0
    %1395 = vmatpush1.msra.mxu0 0.0
    %1396 = vmatprep.subr.mxu0 0.0
    %1397 = vmatpush1.msra.mxu0 0.0
    %1398 = vmatprep.subr.mxu0 0.0
    %1399 = vmatpush1.msra.mxu0 0.0
    %1400 = vmatprep.subr.mxu0 0.0
    %1401 = vmatpush1.msra.mxu0 0.0
    %1402 = vmatprep.subr.mxu0 0.0
    %1403 = vmatpush1.msra.mxu0 0.0
    %1404 = vmatprep.subr.mxu0 0.0
    %1405 = vmatpush1.msra.mxu0 0.0
    %1406 = vmatprep.subr.mxu0 0.0
    %1407 = vmatpush1.msra.mxu0 0.0
    %1408 = vmatprep.subr.mxu0 0.0
    %1409 = vmatpush1.msra.mxu0 0.0
    %1410 = vmatprep.subr.mxu0 0.0
    %1411 = vmatpush1.msra.mxu0 0.0
    %1412 = vmatprep.subr.mxu0 0.0
    %1413 = vmatpush1.msra.mxu0 0.0
    %1414 = vmatprep.subr.mxu0 0.0
    %1415 = vmatpush1.msra.mxu0 0.0
    %1416 = vmatprep.subr.mxu0 0.0
    %1417 = vmatpush1.msra.mxu0 0.0
    %1418 = vmatprep.subr.mxu0 0.0
    %1419 = vmatpush1.msra.mxu0 0.0
    %1420 = vmatprep.subr.mxu0 0.0
    %1421 = vmatpush1.msra.mxu0 0.0
    %1422 = vmatprep.mubr.f32.mxu0 0.0
    %1423 = vmatmul.mubr.f32.gmra.mrb[0].mxu0 %v1286
    %v1424 = vpop.f32.mrb[0].mxu0
    %v1425 = vadd.f32 0.0, %v1424
    %v1426 = vpop.f32.mrb[0].mxu0
    %v1427 = vadd.f32 0.0, %v1426
    %1428 = vdwg.mxu0
    %v1429 = vadd.f32 %v332, %v1354
    %v1430 = vadd.f32 %v334, %v1356
    %v1431 = vadd.f32 %v433, %v1425
    %v1432 = vadd.f32 %v435, %v1427
    %v1433 = vxor.u32 %v1429, 2147483648
    %v1434 = vmul.f32 %v1433, 1.442695
    %v1435 = vpow.pop %v1434
    %v1436 = vadd.f32 %v1435, 1.0
    %v1437 = vrcp.pop %v1436
    %v1438 = vmul.f32 1.0, %v1437
    %v1439 = vxor.u32 %v1430, 2147483648
    %v1440 = vmul.f32 %v1439, 1.442695
    %v1441 = vpow.pop %v1440
    %v1442 = vadd.f32 %v1441, 1.0
    %v1443 = vrcp.pop %v1442
    %v1444 = vmul.f32 1.0, %v1443
    %v1445 = vtanh.pop %v1431
    %v1446 = vxor.u32 %v1432, 2147483648
    %v1447 = vmul.f32 %v1446, 1.442695
    %v1448 = vpow.pop %v1447
    %v1449 = vadd.f32 %v1448, 1.0
    %v1450 = vrcp.pop %v1449
    %v1451 = vmul.f32 1.0, %v1450
    %v1452 = vmul.f32 %v1444, %v1284
    %v1453 = vmul.f32 %v1438, %v1445
    %v1454 = vadd.f32 %v1452, %v1453
    %v1455 = vtanh.pop %v1454
    %v1456 = vmul.f32 %v1451, %v1455
    %v1457 = vmax.f32 %v1456, 0.0
    %v1458 = vld [vmem:[#allocation8] sm:$0xff]
    %v1459 = vld [vmem:[#allocation8 + $0x8] sm:$0xff]
    %v1460 = vld [vmem:[#allocation8 + $0x10] sm:$0xff]
    %v1461 = vld [vmem:[#allocation8 + $0x18] sm:$0xff]
    %v1462 = vld [vmem:[#allocation8 + $0x20] sm:$0xff]
    %v1463 = vld [vmem:[#allocation8 + $0x28] sm:$0xff]
    %v1464 = vld [vmem:[#allocation8 + $0x30] sm:$0xff]
    %v1465 = vld [vmem:[#allocation8 + $0x38] sm:$0xff]
    %v1466 = vld [vmem:[#allocation8 + $0x40] sm:$0xff]
    %v1467 = vld [vmem:[#allocation8 + $0x48] sm:$0xff]
    %v1468 = vld [vmem:[#allocation8 + $0x50] sm:$0xff]
    %v1469 = vld [vmem:[#allocation8 + $0x58] sm:$0xff]
    %v1470 = vld [vmem:[#allocation8 + $0x60] sm:$0xff]
    %v1471 = vld [vmem:[#allocation8 + $0x68] sm:$0xff]
    %v1472 = vld [vmem:[#allocation8 + $0x70] sm:$0xff]
    %v1473 = vld [vmem:[#allocation8 + $0x78] sm:$0xff]
    %v1474 = vld [vmem:[%s5] sm:$0x1]
    %v1476 = vlaneseq
    %v1477 = vshrl.u32 %v1476, 7
    %v1478 = vsub.s32 0, %v1477
    %v1479 = vrot.slane %v1474, %v1478
    %1481 = vmatprep.subr.mxu0 0.0
    %1482 = vmatpush1.msra.mxu0 %v1458
    %1483 = vmatprep.subr.mxu0 0.0
    %1484 = vmatpush1.msra.mxu0 %v1459
    %1485 = vmatprep.subr.mxu0 0.0
    %1486 = vmatpush1.msra.mxu0 %v1460
    %1487 = vmatprep.subr.mxu0 0.0
    %1488 = vmatpush1.msra.mxu0 %v1461
    %1489 = vmatprep.subr.mxu0 0.0
    %1490 = vmatpush1.msra.mxu0 %v1462
    %1491 = vmatprep.subr.mxu0 0.0
    %1492 = vmatpush1.msra.mxu0 %v1463
    %1493 = vmatprep.subr.mxu0 0.0
    %1494 = vmatpush1.msra.mxu0 %v1464
    %1495 = vmatprep.subr.mxu0 0.0
    %1496 = vmatpush1.msra.mxu0 %v1465
    %1497 = vmatprep.subr.mxu0 0.0
    %1498 = vmatpush1.msra.mxu0 %v1466
    %1499 = vmatprep.subr.mxu0 0.0
    %1500 = vmatpush1.msra.mxu0 %v1467
    %1501 = vmatprep.subr.mxu0 0.0
    %1502 = vmatpush1.msra.mxu0 %v1468
    %1503 = vmatprep.subr.mxu0 0.0
    %1504 = vmatpush1.msra.mxu0 %v1469
    %1505 = vmatprep.subr.mxu0 0.0
    %1506 = vmatpush1.msra.mxu0 %v1470
    %1507 = vmatprep.subr.mxu0 0.0
    %1508 = vmatpush1.msra.mxu0 %v1471
    %1509 = vmatprep.subr.mxu0 0.0
    %1510 = vmatpush1.msra.mxu0 %v1472
    %1511 = vmatprep.subr.mxu0 0.0
    %1512 = vmatpush1.msra.mxu0 %v1473
    %1513 = vmatprep.subr.mxu0 0.0
    %1514 = vmatpush1.msra.mxu0 0.0
    %1515 = vmatprep.subr.mxu0 0.0
    %1516 = vmatpush1.msra.mxu0 0.0
    %1517 = vmatprep.subr.mxu0 0.0
    %1518 = vmatpush1.msra.mxu0 0.0
    %1519 = vmatprep.subr.mxu0 0.0
    %1520 = vmatpush1.msra.mxu0 0.0
    %1521 = vmatprep.subr.mxu0 0.0
    %1522 = vmatpush1.msra.mxu0 0.0
    %1523 = vmatprep.subr.mxu0 0.0
    %1524 = vmatpush1.msra.mxu0 0.0
    %1525 = vmatprep.subr.mxu0 0.0
    %1526 = vmatpush1.msra.mxu0 0.0
    %1527 = vmatprep.subr.mxu0 0.0
    %1528 = vmatpush1.msra.mxu0 0.0
    %1529 = vmatprep.subr.mxu0 0.0
    %1530 = vmatpush1.msra.mxu0 0.0
    %1531 = vmatprep.subr.mxu0 0.0
    %1532 = vmatpush1.msra.mxu0 0.0
    %1533 = vmatprep.subr.mxu0 0.0
    %1534 = vmatpush1.msra.mxu0 0.0
    %1535 = vmatprep.subr.mxu0 0.0
    %1536 = vmatpush1.msra.mxu0 0.0
    %1537 = vmatprep.subr.mxu0 0.0
    %1538 = vmatpush1.msra.mxu0 0.0
    %1539 = vmatprep.subr.mxu0 0.0
    %1540 = vmatpush1.msra.mxu0 0.0
    %1541 = vmatprep.subr.mxu0 0.0
    %1542 = vmatpush1.msra.mxu0 0.0
    %1543 = vmatprep.subr.mxu0 0.0
    %1544 = vmatpush1.msra.mxu0 0.0
    %1545 = vmatprep.mubr.f32.mxu0 0.0
    %1546 = vmatmul.mubr.f32.gmra.mrb[0].mxu0 %v1457
    %v1547 = vpop.f32.mrb[0].mxu0
    %v1548 = vadd.f32 %v1479, %v1547
    %v1549 = vpop.f32.mrb[0].mxu0
    %1550 = vdwg.mxu0
    %1551 = vst [vmem:[#allocation10] sm:$0xff] %v1548
    // Predicated region
    $region42: #{tpu_custom_call.1} parent=1 // pred_check
      _
    $region43: #{tpu_custom_call.1} parent=1 // pred_check_branch
      %1553 = sbr.rel (0) target = $region45
    $region44: #{tpu_custom_call.1} parent=1 // pred_region
      %s1555 = ssub.s32 128, 128
      %1556 = vsyncadd [#allocation4], %s1555
      %s1558 = sshll.u32 [#allocation10], 4
      %s1559 = int_to_ptr.vmem [resolvable:$true] %s1558
      %1561 = dma.vmem_to_hbm [thread:$0]  %s1559, 128, %s6, [#allocation4]
    $region45: #{tpu_custom_call.1} parent=1 // pred_fallthru
      _
    // Predicated region
    $region46: #{tpu_custom_call.1} parent=1 // pred_check
      _
    $region47: #{tpu_custom_call.1} parent=1 // pred_check_branch
      %1563 = sbr.rel (0) target = $region49
    $region48: #{tpu_custom_call.1} parent=1 // pred_region
      %1564 = dma.done [#allocation4], 128
    $region49: #{tpu_custom_call.1} parent=1 // pred_fallthru
      _
    %1565 = vsyncpa [#allocation3], 1
    %1566 = vsyncpa [#allocation6], 1
    %1567 = vsyncpa [#allocation9], 1
    %1568 = vsyncpa [#allocation4], 1

</llo_original>
